<compile_context>
chip_gen: v7x
topology: tpu7x:2x2x1
jax: 0.10.0
libtpu: 0.0.40
codegen_flags: <defaults>
</compile_context>

<pallas_src>
import jax
import jax.numpy as jnp
import numpy as np
from jax.experimental import pallas as pl
from jax.experimental.pallas import tpu as pltpu

# Dimensions from the module definition
LATENT_DIM = 64
HIDDEN_DIM3 = 128
HIDDEN_DIM2 = 256
HIDDEN_DIM = 400
OUTPUT_DIM = 256  # output_dim constructor arg (chosen lane-aligned & deterministic)

WEIGHT_DTYPE = jnp.bfloat16


def _round_up(x, m):
    return ((x + m - 1) // m) * m


def _leaky_relu_05(h):
    # nn.LeakyReLU(0.5), f32 on the VPU
    return jnp.where(h > 0, h, 0.5 * h)


# ----------------------------------------------------------------------------
# Kernel: whole 5-layer MLP fused per batch tile.
# ----------------------------------------------------------------------------
def decoder_kernel(x_ref,
                   w1_ref, b1_ref,
                   w2_ref, b2_ref,
                   w3_ref, b3_ref,
                   w4_ref, b4_ref,
                   w5_ref, b5_ref,
                   o_ref):
    def dense(h, w_ref, b_ref):
        # bf16 x bf16 -> f32 accumulation on the MXU; bias add in f32.
        return (jnp.dot(h.astype(w_ref.dtype), w_ref[...],
                        preferred_element_type=jnp.float32)
                + b_ref[...])

    h = _leaky_relu_05(dense(x_ref[...], w1_ref, b1_ref))   # FC_hidden
    h = _leaky_relu_05(dense(h, w2_ref, b2_ref))            # FC_hidden4
    h = _leaky_relu_05(dense(h, w3_ref, b3_ref))            # FC_hidden3
    h = _leaky_relu_05(dense(h, w4_ref, b4_ref))            # FC_hidden2
    o_ref[...] = jax.nn.sigmoid(dense(h, w5_ref, b5_ref))   # FC_output + sigmoid


# ----------------------------------------------------------------------------
# Host-side parameter prep: pad interior hidden dims to multiples of 128 and
# cast weights to bf16 (biases stay f32).  Zero padding is numerically exact
# through LeakyReLU.
# ----------------------------------------------------------------------------
def _pad_and_cast_params(params, weight_dtype):
    dims = [params[0][0].shape[0]] + [w.shape[1] for w, _ in params]
    padded_dims = ([dims[0]]
                   + [_round_up(d, 128) for d in dims[1:-1]]
                   + [dims[-1]])
    out = []
    for idx, (w, b) in enumerate(params):
        di, do = padded_dims[idx], padded_dims[idx + 1]
        w_p = jnp.zeros((di, do), jnp.float32)
        w_p = w_p.at[: w.shape[0], : w.shape[1]].set(w.astype(jnp.float32))
        b_p = jnp.zeros((1, do), jnp.float32)
        b_p = b_p.at[:, : b.shape[-1]].set(b.reshape(1, -1).astype(jnp.float32))
        out.append((w_p.astype(weight_dtype), b_p))
    return out


# ----------------------------------------------------------------------------
# Wrapper: batch grid with resident weights.
# ----------------------------------------------------------------------------
def decoder_forward(x, params, *, tb=None, weight_dtype=WEIGHT_DTYPE):
    """x: (B, latent_dim) f32. params: list of (W(in,out), b(out,) or (1,out))."""
    B, latent = x.shape
    out_dim = params[-1][0].shape[1]

    # Batch tile: fill the MXU at large batch (256), keep sublane-aligned (8)
    # and avoid wasted padded rows at small batch.
    if tb is None:
        tb = 256 if B >= 256 else _round_up(B, 8)
    B_pad = _round_up(B, tb)
    if B_pad != B:
        x = jnp.pad(x, ((0, B_pad - B), (0, 0)))
    x = x.astype(jnp.float32)

    padded_params = _pad_and_cast_params(params, weight_dtype)
    flat = []
    for w, b in padded_params:
        flat.extend([w, b])

    def batch_map(i):
        return (i, 0)

    def resident_map(i):          # same block every step -> weights stay in VMEM
        return (0, 0)

    in_specs = [pl.BlockSpec((tb, latent), batch_map)]
    for arr in flat:
        in_specs.append(pl.BlockSpec(arr.shape, resident_map))
    out_specs = pl.BlockSpec((tb, out_dim), batch_map)

    out = pl.pallas_call(
        decoder_kernel,
        out_shape=jax.ShapeDtypeStruct((B_pad, out_dim), jnp.float32),
        grid=(B_pad // tb,),
        in_specs=in_specs,
        out_specs=out_specs,
        compiler_params=pltpu.CompilerParams(
            dimension_semantics=("parallel",),
        ),
    )(x, *flat)

    return out[:B]


# ----------------------------------------------------------------------------
# Init + pure-JAX reference (same bf16-weight / f32-accumulate math).
# ----------------------------------------------------------------------------
def init_params(key):
    """Deterministic init mimicking nn.Linear default: uniform(-1/sqrt(in), 1/sqrt(in))."""
    dims = [(LATENT_DIM, HIDDEN_DIM3),
            (HIDDEN_DIM3, HIDDEN_DIM2),
            (HIDDEN_DIM2, HIDDEN_DIM),
            (HIDDEN_DIM, HIDDEN_DIM),
            (HIDDEN_DIM, OUTPUT_DIM)]
    params = []
    for (fan_in, fan_out) in dims:
        key, kw, kb = jax.random.split(key, 3)
        bound = 1.0 / np.sqrt(fan_in)
        w = jax.random.uniform(kw, (fan_in, fan_out), jnp.float32, -bound, bound)
        b = jax.random.uniform(kb, (1, fan_out), jnp.float32, -bound, bound)
        params.append((w, b))
    return params


def reference_forward(x, params, weight_dtype=WEIGHT_DTYPE):
    h = x.astype(jnp.float32)
    n = len(params)
    for i, (w, b) in enumerate(params):
        h = jnp.dot(h.astype(weight_dtype), w.astype(weight_dtype),
                    preferred_element_type=jnp.float32) + b.reshape(1, -1)
        if i < n - 1:
            h = jnp.where(h > 0, h, 0.5 * h)
        else:
            h = jax.nn.sigmoid(h)
    return h


if __name__ == "__main__":
    key = jax.random.PRNGKey(0)
    key, kx = jax.random.split(key)

    B = 12  # deliberately not a multiple of 8 to exercise batch padding
    x = jax.random.normal(kx, (B, LATENT_DIM), jnp.float32)
    params = init_params(key)

    ref = reference_forward(x, params)

    # Default tile (single grid step at this tiny batch).
    out = jax.block_until_ready(decoder_forward(x, params))
    assert out.shape == (B, OUTPUT_DIM)
    np.testing.assert_allclose(np.asarray(out), np.asarray(ref),
                               rtol=1e-4, atol=1e-4)

    # Explicit small tile -> multi-step batch grid with resident weights.
    out_tiled = jax.block_until_ready(decoder_forward(x, params, tb=8))
    np.testing.assert_allclose(np.asarray(out_tiled), np.asarray(ref),
                               rtol=1e-4, atol=1e-4)

    print("KERNEL_OK")
</pallas_src>

<mosaic_0001>
module attributes {stable_mosaic.version = 11 : i64} {
  func.func @decoder_kernel(%arg0: i32, %arg1: memref<16x64xf32, #tpu.memory_space<vmem>>, %arg2: memref<64x128xbf16, #tpu.memory_space<vmem>>, %arg3: memref<1x128xf32, #tpu.memory_space<vmem>>, %arg4: memref<128x256xbf16, #tpu.memory_space<vmem>>, %arg5: memref<1x256xf32, #tpu.memory_space<vmem>>, %arg6: memref<256x512xbf16, #tpu.memory_space<vmem>>, %arg7: memref<1x512xf32, #tpu.memory_space<vmem>>, %arg8: memref<512x512xbf16, #tpu.memory_space<vmem>>, %arg9: memref<1x512xf32, #tpu.memory_space<vmem>>, %arg10: memref<512x256xbf16, #tpu.memory_space<vmem>>, %arg11: memref<1x256xf32, #tpu.memory_space<vmem>>, %arg12: memref<16x256xf32, #tpu.memory_space<vmem>>) attributes {dimension_semantics = [#tpu.dimension_semantics<parallel>], iteration_bounds = array<i64: 1>, scalar_prefetch = 0 : i64, scratch_operands = 0 : i64, tpu.core_type = #tpu.core_type<tc>, window_params = [{transform_indices = @transform_0, window_bounds = array<i64: 16, 64>}, {pipeline_mode = #tpu.pipeline_mode<synchronous>, transform_indices = @transform_1, window_bounds = array<i64: 64, 128>}, {pipeline_mode = #tpu.pipeline_mode<synchronous>, transform_indices = @transform_2, window_bounds = array<i64: 1, 128>}, {pipeline_mode = #tpu.pipeline_mode<synchronous>, transform_indices = @transform_3, window_bounds = array<i64: 128, 256>}, {pipeline_mode = #tpu.pipeline_mode<synchronous>, transform_indices = @transform_4, window_bounds = array<i64: 1, 256>}, {pipeline_mode = #tpu.pipeline_mode<synchronous>, transform_indices = @transform_5, window_bounds = array<i64: 256, 512>}, {pipeline_mode = #tpu.pipeline_mode<synchronous>, transform_indices = @transform_6, window_bounds = array<i64: 1, 512>}, {pipeline_mode = #tpu.pipeline_mode<synchronous>, transform_indices = @transform_7, window_bounds = array<i64: 512, 512>}, {pipeline_mode = #tpu.pipeline_mode<synchronous>, transform_indices = @transform_8, window_bounds = array<i64: 1, 512>}, {pipeline_mode = #tpu.pipeline_mode<synchronous>, transform_indices = @transform_9, window_bounds = array<i64: 512, 256>}, {pipeline_mode = #tpu.pipeline_mode<synchronous>, transform_indices = @transform_10, window_bounds = array<i64: 1, 256>}, {transform_indices = @transform_11, window_bounds = array<i64: 16, 256>}]} {
    %c0 = arith.constant 0 : index
    %c0_0 = arith.constant 0 : index
    %0 = vector.load %arg1[%c0, %c0_0] : memref<16x64xf32, #tpu.memory_space<vmem>>, vector<16x64xf32>
    %1 = arith.truncf %0 : vector<16x64xf32> to vector<16x64xbf16>
    %c0_1 = arith.constant 0 : index
    %c0_2 = arith.constant 0 : index
    %2 = vector.load %arg2[%c0_1, %c0_2] : memref<64x128xbf16, #tpu.memory_space<vmem>>, vector<64x128xbf16>
    %cst = arith.constant dense<0.000000e+00> : vector<16x128xf32>
    %3 = tpu.matmul %1, %2, %cst {dimension_numbers = #tpu.dot_dimension_numbers<[1], [0], [0], [1], [0, 0, 1, 1], [], []>} : vector<16x64xbf16>, vector<64x128xbf16>, vector<16x128xf32> -> vector<16x128xf32>
    %c0_3 = arith.constant 0 : index
    %c0_4 = arith.constant 0 : index
    %4 = vector.load %arg3[%c0_3, %c0_4] : memref<1x128xf32, #tpu.memory_space<vmem>>, vector<1x128xf32>
    %5 = vector.broadcast %4 : vector<1x128xf32> to vector<16x128xf32>
    %6 = arith.addf %3, %5 : vector<16x128xf32>
    %cst_5 = arith.constant 0.000000e+00 : f32
    %7 = vector.broadcast %cst_5 : f32 to vector<16x128xf32>
    %8 = arith.cmpf ogt, %6, %7 : vector<16x128xf32>
    %cst_6 = arith.constant 5.000000e-01 : f32
    %9 = vector.broadcast %cst_6 : f32 to vector<16x128xf32>
    %10 = arith.mulf %9, %6 : vector<16x128xf32>
    %11 = arith.select %8, %6, %10 : vector<16x128xi1>, vector<16x128xf32>
    %12 = arith.truncf %11 : vector<16x128xf32> to vector<16x128xbf16>
    %c0_7 = arith.constant 0 : index
    %c0_8 = arith.constant 0 : index
    %13 = vector.load %arg4[%c0_7, %c0_8] : memref<128x256xbf16, #tpu.memory_space<vmem>>, vector<128x256xbf16>
    %cst_9 = arith.constant dense<0.000000e+00> : vector<16x256xf32>
    %14 = tpu.matmul %12, %13, %cst_9 {dimension_numbers = #tpu.dot_dimension_numbers<[1], [0], [0], [1], [0, 0, 1, 1], [], []>} : vector<16x128xbf16>, vector<128x256xbf16>, vector<16x256xf32> -> vector<16x256xf32>
    %c0_10 = arith.constant 0 : index
    %c0_11 = arith.constant 0 : index
    %15 = vector.load %arg5[%c0_10, %c0_11] : memref<1x256xf32, #tpu.memory_space<vmem>>, vector<1x256xf32>
    %16 = vector.broadcast %15 : vector<1x256xf32> to vector<16x256xf32>
    %17 = arith.addf %14, %16 : vector<16x256xf32>
    %cst_12 = arith.constant 0.000000e+00 : f32
    %18 = vector.broadcast %cst_12 : f32 to vector<16x256xf32>
    %19 = arith.cmpf ogt, %17, %18 : vector<16x256xf32>
    %cst_13 = arith.constant 5.000000e-01 : f32
    %20 = vector.broadcast %cst_13 : f32 to vector<16x256xf32>
    %21 = arith.mulf %20, %17 : vector<16x256xf32>
    %22 = arith.select %19, %17, %21 : vector<16x256xi1>, vector<16x256xf32>
    %23 = arith.truncf %22 : vector<16x256xf32> to vector<16x256xbf16>
    %c0_14 = arith.constant 0 : index
    %c0_15 = arith.constant 0 : index
    %24 = vector.load %arg6[%c0_14, %c0_15] : memref<256x512xbf16, #tpu.memory_space<vmem>>, vector<256x512xbf16>
    %cst_16 = arith.constant dense<0.000000e+00> : vector<16x512xf32>
    %25 = tpu.matmul %23, %24, %cst_16 {dimension_numbers = #tpu.dot_dimension_numbers<[1], [0], [0], [1], [0, 0, 1, 1], [], []>} : vector<16x256xbf16>, vector<256x512xbf16>, vector<16x512xf32> -> vector<16x512xf32>
    %c0_17 = arith.constant 0 : index
    %c0_18 = arith.constant 0 : index
    %26 = vector.load %arg7[%c0_17, %c0_18] : memref<1x512xf32, #tpu.memory_space<vmem>>, vector<1x512xf32>
    %27 = vector.broadcast %26 : vector<1x512xf32> to vector<16x512xf32>
    %28 = arith.addf %25, %27 : vector<16x512xf32>
    %cst_19 = arith.constant 0.000000e+00 : f32
    %29 = vector.broadcast %cst_19 : f32 to vector<16x512xf32>
    %30 = arith.cmpf ogt, %28, %29 : vector<16x512xf32>
    %cst_20 = arith.constant 5.000000e-01 : f32
    %31 = vector.broadcast %cst_20 : f32 to vector<16x512xf32>
    %32 = arith.mulf %31, %28 : vector<16x512xf32>
    %33 = arith.select %30, %28, %32 : vector<16x512xi1>, vector<16x512xf32>
    %34 = arith.truncf %33 : vector<16x512xf32> to vector<16x512xbf16>
    %c0_21 = arith.constant 0 : index
    %c0_22 = arith.constant 0 : index
    %35 = vector.load %arg8[%c0_21, %c0_22] : memref<512x512xbf16, #tpu.memory_space<vmem>>, vector<512x512xbf16>
    %cst_23 = arith.constant dense<0.000000e+00> : vector<16x512xf32>
    %36 = tpu.matmul %34, %35, %cst_23 {dimension_numbers = #tpu.dot_dimension_numbers<[1], [0], [0], [1], [0, 0, 1, 1], [], []>} : vector<16x512xbf16>, vector<512x512xbf16>, vector<16x512xf32> -> vector<16x512xf32>
    %c0_24 = arith.constant 0 : index
    %c0_25 = arith.constant 0 : index
    %37 = vector.load %arg9[%c0_24, %c0_25] : memref<1x512xf32, #tpu.memory_space<vmem>>, vector<1x512xf32>
    %38 = vector.broadcast %37 : vector<1x512xf32> to vector<16x512xf32>
    %39 = arith.addf %36, %38 : vector<16x512xf32>
    %cst_26 = arith.constant 0.000000e+00 : f32
    %40 = vector.broadcast %cst_26 : f32 to vector<16x512xf32>
    %41 = arith.cmpf ogt, %39, %40 : vector<16x512xf32>
    %cst_27 = arith.constant 5.000000e-01 : f32
    %42 = vector.broadcast %cst_27 : f32 to vector<16x512xf32>
    %43 = arith.mulf %42, %39 : vector<16x512xf32>
    %44 = arith.select %41, %39, %43 : vector<16x512xi1>, vector<16x512xf32>
    %45 = arith.truncf %44 : vector<16x512xf32> to vector<16x512xbf16>
    %c0_28 = arith.constant 0 : index
    %c0_29 = arith.constant 0 : index
    %46 = vector.load %arg10[%c0_28, %c0_29] : memref<512x256xbf16, #tpu.memory_space<vmem>>, vector<512x256xbf16>
    %cst_30 = arith.constant dense<0.000000e+00> : vector<16x256xf32>
    %47 = tpu.matmul %45, %46, %cst_30 {dimension_numbers = #tpu.dot_dimension_numbers<[1], [0], [0], [1], [0, 0, 1, 1], [], []>} : vector<16x512xbf16>, vector<512x256xbf16>, vector<16x256xf32> -> vector<16x256xf32>
    %c0_31 = arith.constant 0 : index
    %c0_32 = arith.constant 0 : index
    %48 = vector.load %arg11[%c0_31, %c0_32] : memref<1x256xf32, #tpu.memory_space<vmem>>, vector<1x256xf32>
    %49 = vector.broadcast %48 : vector<1x256xf32> to vector<16x256xf32>
    %50 = arith.addf %47, %49 : vector<16x256xf32>
    %51 = arith.negf %50 : vector<16x256xf32>
    %52 = math.exp %51 : vector<16x256xf32>
    %cst_33 = arith.constant 1.000000e+00 : f32
    %53 = vector.broadcast %cst_33 : f32 to vector<16x256xf32>
    %54 = arith.addf %53, %52 : vector<16x256xf32>
    %55 = arith.divf %53, %54 : vector<16x256xf32>
    %c0_34 = arith.constant 0 : index
    %c0_35 = arith.constant 0 : index
    %56 = vector.load %arg12[%c0_34, %c0_35] : memref<16x256xf32, #tpu.memory_space<vmem>>, vector<16x256xf32>
    tpu.vector_store %arg12[%c0_34, %c0_35], %55 {strides = array<i32>} : memref<16x256xf32, #tpu.memory_space<vmem>>, vector<16x256xf32>,
    return
  }
  func.func @transform_0(%arg0: i32) -> (i32, i32) {
    %c0_i32 = arith.constant 0 : i32
    %c0_i32_0 = arith.constant 0 : i32
    return %arg0, %c0_i32 : i32, i32
  }
  func.func @transform_1(%arg0: i32) -> (i32, i32) {
    %c0_i32 = arith.constant 0 : i32
    %c0_i32_0 = arith.constant 0 : i32
    %c0_i32_1 = arith.constant 0 : i32
    return %c0_i32, %c0_i32_0 : i32, i32
  }
  func.func @transform_2(%arg0: i32) -> (i32, i32) {
    %c0_i32 = arith.constant 0 : i32
    %c0_i32_0 = arith.constant 0 : i32
    %c0_i32_1 = arith.constant 0 : i32
    return %c0_i32, %c0_i32_0 : i32, i32
  }
  func.func @transform_3(%arg0: i32) -> (i32, i32) {
    %c0_i32 = arith.constant 0 : i32
    %c0_i32_0 = arith.constant 0 : i32
    %c0_i32_1 = arith.constant 0 : i32
    return %c0_i32, %c0_i32_0 : i32, i32
  }
  func.func @transform_4(%arg0: i32) -> (i32, i32) {
    %c0_i32 = arith.constant 0 : i32
    %c0_i32_0 = arith.constant 0 : i32
    %c0_i32_1 = arith.constant 0 : i32
    return %c0_i32, %c0_i32_0 : i32, i32
  }
  func.func @transform_5(%arg0: i32) -> (i32, i32) {
    %c0_i32 = arith.constant 0 : i32
    %c0_i32_0 = arith.constant 0 : i32
    %c0_i32_1 = arith.constant 0 : i32
    return %c0_i32, %c0_i32_0 : i32, i32
  }
  func.func @transform_6(%arg0: i32) -> (i32, i32) {
    %c0_i32 = arith.constant 0 : i32
    %c0_i32_0 = arith.constant 0 : i32
    %c0_i32_1 = arith.constant 0 : i32
    return %c0_i32, %c0_i32_0 : i32, i32
  }
  func.func @transform_7(%arg0: i32) -> (i32, i32) {
    %c0_i32 = arith.constant 0 : i32
    %c0_i32_0 = arith.constant 0 : i32
    %c0_i32_1 = arith.constant 0 : i32
    return %c0_i32, %c0_i32_0 : i32, i32
  }
  func.func @transform_8(%arg0: i32) -> (i32, i32) {
    %c0_i32 = arith.constant 0 : i32
    %c0_i32_0 = arith.constant 0 : i32
    %c0_i32_1 = arith.constant 0 : i32
    return %c0_i32, %c0_i32_0 : i32, i32
  }
  func.func @transform_9(%arg0: i32) -> (i32, i32) {
    %c0_i32 = arith.constant 0 : i32
    %c0_i32_0 = arith.constant 0 : i32
    %c0_i32_1 = arith.constant 0 : i32
    return %c0_i32, %c0_i32_0 : i32, i32
  }
  func.func @transform_10(%arg0: i32) -> (i32, i32) {
    %c0_i32 = arith.constant 0 : i32
    %c0_i32_0 = arith.constant 0 : i32
    %c0_i32_1 = arith.constant 0 : i32
    return %c0_i32, %c0_i32_0 : i32, i32
  }
  func.func @transform_11(%arg0: i32) -> (i32, i32) {
    %c0_i32 = arith.constant 0 : i32
    %c0_i32_0 = arith.constant 0 : i32
    return %arg0, %c0_i32 : i32, i32
  }
}

</mosaic_0001>

<llo_original>
// kernel: tpu_custom_call.1
$region0: #{tpu_custom_call.1}
  #allocation0 [shape = 'u32[]', space=smem, size = 0x4, offset = 0x4, fixed_abs, tag = 'smem constant byte address 0x4 - core index']
  #allocation1 [shape = 'u32[144,128]{1,0:T(1,128)}', space=vmem, size = 0x12000, scoped, tag = 'internal scratch']
  %s0 = inlined_call_operand.hbm [shape: f32[16,64], index: 0, kind: input, shape index: {}]
  %s1 = inlined_call_operand.hbm [shape: bf16[64,128], index: 1, kind: input, shape index: {}]
  %s2 = inlined_call_operand.vmem [shape: f32[1,128], index: 2, kind: input, shape index: {}]
  %s3 = inlined_call_operand.hbm [shape: bf16[128,256], index: 3, kind: input, shape index: {}]
  %s4 = inlined_call_operand.vmem [shape: f32[1,256], index: 4, kind: input, shape index: {}]
  %s5 = inlined_call_operand.hbm [shape: bf16[256,512], index: 5, kind: input, shape index: {}]
  %s6 = inlined_call_operand.vmem [shape: f32[1,512], index: 6, kind: input, shape index: {}]
  %s7 = inlined_call_operand.hbm [shape: bf16[512,512], index: 7, kind: input, shape index: {}]
  %s8 = inlined_call_operand.vmem [shape: f32[1,512], index: 8, kind: input, shape index: {}]
  %s9 = inlined_call_operand.hbm [shape: bf16[512,256], index: 9, kind: input, shape index: {}]
  %s10 = inlined_call_operand.vmem [shape: f32[1,256], index: 10, kind: input, shape index: {}]
  %s11 = inlined_call_operand.hbm [shape: f32[16,256], index: 11, kind: output, shape index: {}]
  %s12 = sld [smem:[#allocation0]]
  $region78: #{tpu_custom_call.1} parent=0
    _
  %s14 = ssub.s32 1, %s12
  %s15 = scalar_select 0, %s14, %s12
  $region1: #{tpu_custom_call.1} parent=0
    #allocation2 [shape = 'u8[8192]{0}', space=vmem, size = 0x2000, scoped, tag = 'input window, operand 0, single buffered']
    #allocation3 [shape = 's32[1]{0}', space=sflag, size = 0x4, scoped, tag = 'scoped memory for tpu_custom_call.1']
    #allocation4 [shape = 's32[1]{0}', space=sflag, size = 0x4, scoped, tag = 'scoped memory for tpu_custom_call.1']
    #allocation5 [shape = 'u8[16384]{0}', space=vmem, size = 0x4000, scoped, tag = 'input window, operand 1, single buffered']
    #allocation6 [shape = 's32[1]{0}', space=sflag, size = 0x4, scoped, tag = 'scoped memory for tpu_custom_call.1']
    #allocation7 [shape = 'u8[65536]{0}', space=vmem, size = 0x10000, scoped, tag = 'input window, operand 3, single buffered']
    #allocation8 [shape = 'u8[262144]{0}', space=vmem, size = 0x40000, scoped, tag = 'input window, operand 5, single buffered']
    #allocation9 [shape = 's32[1]{0}', space=sflag, size = 0x4, scoped, tag = 'scoped memory for tpu_custom_call.1']
    #allocation10 [shape = 'u8[524288]{0}', space=vmem, size = 0x80000, scoped, tag = 'input window, operand 7, single buffered']
    #allocation11 [shape = 'u8[262144]{0}', space=vmem, size = 0x40000, scoped, tag = 'input window, operand 9, single buffered']
    #allocation12 [shape = 's32[1]{0}', space=sflag, size = 0x4, scoped, tag = 'scoped memory for tpu_custom_call.1']
    #allocation13 [shape = 'u8[16384]{0}', space=vmem, size = 0x4000, scoped, tag = 'output window, operand 0, single buffered']
    %16 = vsyncpa [#allocation3], 0
    %17 = vsyncpa [#allocation6], 0
    %18 = vsyncpa [#allocation9], 0
    %19 = vsyncpa [#allocation12], 0
    %20 = vsyncpa [#allocation4], 0
    // Predicated region
    $region2: #{tpu_custom_call.1} parent=1 // pred_check
      _
    $region3: #{tpu_custom_call.1} parent=1 // pred_check_branch
      %22 = sbr.rel (0) target = $region5
    $region4: #{tpu_custom_call.1} parent=1 // pred_region
      %s24 = ssub.s32 256, 256
      %25 = vsyncadd [#allocation3], %s24
      %s26 = sshll.u32 [#allocation2], 4
      %s27 = int_to_ptr.vmem [resolvable:$true] %s26
      %32 = dma.hbm_to_vmem [thread:$0]  %s0, 256, %s27, [#allocation3], 128, 128, 8
    $region5: #{tpu_custom_call.1} parent=1 // pred_fallthru
      _
    // Predicated region
    $region6: #{tpu_custom_call.1} parent=1 // pred_check
      _
    $region7: #{tpu_custom_call.1} parent=1 // pred_check_branch
      %34 = sbr.rel (0) target = $region9
    $region8: #{tpu_custom_call.1} parent=1 // pred_region
      %s36 = ssub.s32 512, 512
      %37 = vsyncadd [#allocation6], %s36
      %s38 = sshll.u32 [#allocation5], 4
      %s39 = int_to_ptr.vmem [resolvable:$true] %s38
      %44 = dma.hbm_to_vmem [thread:$0]  %s1, 512, %s39, [#allocation6], 64, 64, 4
    $region9: #{tpu_custom_call.1} parent=1 // pred_fallthru
      _
    // Predicated region
    $region10: #{tpu_custom_call.1} parent=1 // pred_check
      _
    $region11: #{tpu_custom_call.1} parent=1 // pred_check_branch
      %46 = sbr.rel (0) target = $region13
    $region12: #{tpu_custom_call.1} parent=1 // pred_region
      _
    $region13: #{tpu_custom_call.1} parent=1 // pred_fallthru
      _
    // Predicated region
    $region14: #{tpu_custom_call.1} parent=1 // pred_check
      _
    $region15: #{tpu_custom_call.1} parent=1 // pred_check_branch
      %48 = sbr.rel (0) target = $region17
    $region16: #{tpu_custom_call.1} parent=1 // pred_region
      %s50 = ssub.s32 2048, 2048
      %51 = vsyncadd [#allocation6], %s50
      %s52 = sshll.u32 [#allocation7], 4
      %s53 = int_to_ptr.vmem [resolvable:$true] %s52
      %58 = dma.hbm_to_vmem [thread:$0]  %s3, 2048, %s53, [#allocation6], 128, 128, 8
    $region17: #{tpu_custom_call.1} parent=1 // pred_fallthru
      _
    // Predicated region
    $region18: #{tpu_custom_call.1} parent=1 // pred_check
      _
    $region19: #{tpu_custom_call.1} parent=1 // pred_check_branch
      %60 = sbr.rel (0) target = $region21
    $region20: #{tpu_custom_call.1} parent=1 // pred_region
      _
    $region21: #{tpu_custom_call.1} parent=1 // pred_fallthru
      _
    // Predicated region
    $region22: #{tpu_custom_call.1} parent=1 // pred_check
      _
    $region23: #{tpu_custom_call.1} parent=1 // pred_check_branch
      %62 = sbr.rel (0) target = $region25
    $region24: #{tpu_custom_call.1} parent=1 // pred_region
      %s64 = ssub.s32 8192, 8192
      %65 = vsyncadd [#allocation9], %s64
      %s66 = sshll.u32 [#allocation8], 4
      %s67 = int_to_ptr.vmem [resolvable:$true] %s66
      %72 = dma.hbm_to_vmem [thread:$0]  %s5, 8192, %s67, [#allocation9], 256, 256, 16
    $region25: #{tpu_custom_call.1} parent=1 // pred_fallthru
      _
    // Predicated region
    $region26: #{tpu_custom_call.1} parent=1 // pred_check
      _
    $region27: #{tpu_custom_call.1} parent=1 // pred_check_branch
      %74 = sbr.rel (0) target = $region29
    $region28: #{tpu_custom_call.1} parent=1 // pred_region
      _
    $region29: #{tpu_custom_call.1} parent=1 // pred_fallthru
      _
    // Predicated region
    $region30: #{tpu_custom_call.1} parent=1 // pred_check
      _
    $region31: #{tpu_custom_call.1} parent=1 // pred_check_branch
      %76 = sbr.rel (0) target = $region33
    $region32: #{tpu_custom_call.1} parent=1 // pred_region
      %s78 = ssub.s32 16384, 16384
      %79 = vsyncadd [#allocation9], %s78
      %s80 = sshll.u32 [#allocation10], 4
      %s81 = int_to_ptr.vmem [resolvable:$true] %s80
      %86 = dma.hbm_to_vmem [thread:$0]  %s7, 16384, %s81, [#allocation9], 256, 256, 16
    $region33: #{tpu_custom_call.1} parent=1 // pred_fallthru
      _
    // Predicated region
    $region34: #{tpu_custom_call.1} parent=1 // pred_check
      _
    $region35: #{tpu_custom_call.1} parent=1 // pred_check_branch
      %88 = sbr.rel (0) target = $region37
    $region36: #{tpu_custom_call.1} parent=1 // pred_region
      _
    $region37: #{tpu_custom_call.1} parent=1 // pred_fallthru
      _
    // Predicated region
    $region38: #{tpu_custom_call.1} parent=1 // pred_check
      _
    $region39: #{tpu_custom_call.1} parent=1 // pred_check_branch
      %90 = sbr.rel (0) target = $region41
    $region40: #{tpu_custom_call.1} parent=1 // pred_region
      %s92 = ssub.s32 8192, 8192
      %93 = vsyncadd [#allocation12], %s92
      %s94 = sshll.u32 [#allocation11], 4
      %s95 = int_to_ptr.vmem [resolvable:$true] %s94
      %100 = dma.hbm_to_vmem [thread:$0]  %s9, 8192, %s95, [#allocation12], 128, 128, 8
    $region41: #{tpu_custom_call.1} parent=1 // pred_fallthru
      _
    // Predicated region
    $region42: #{tpu_custom_call.1} parent=1 // pred_check
      _
    $region43: #{tpu_custom_call.1} parent=1 // pred_check_branch
      %102 = sbr.rel (0) target = $region45
    $region44: #{tpu_custom_call.1} parent=1 // pred_region
      _
    $region45: #{tpu_custom_call.1} parent=1 // pred_fallthru
      _
    // Predicated region
    $region46: #{tpu_custom_call.1} parent=1 // pred_check
      _
    $region47: #{tpu_custom_call.1} parent=1 // pred_check_branch
      %104 = sbr.rel (0) target = $region49
    $region48: #{tpu_custom_call.1} parent=1 // pred_region
      %105 = dma.done [#allocation3], 256
    $region49: #{tpu_custom_call.1} parent=1 // pred_fallthru
      _
    // Predicated region
    $region50: #{tpu_custom_call.1} parent=1 // pred_check
      _
    $region51: #{tpu_custom_call.1} parent=1 // pred_check_branch
      %107 = sbr.rel (0) target = $region53
    $region52: #{tpu_custom_call.1} parent=1 // pred_region
      %108 = dma.done [#allocation6], 512
    $region53: #{tpu_custom_call.1} parent=1 // pred_fallthru
      _
    // Predicated region
    $region54: #{tpu_custom_call.1} parent=1 // pred_check
      _
    $region55: #{tpu_custom_call.1} parent=1 // pred_check_branch
      %110 = sbr.rel (0) target = $region57
    $region56: #{tpu_custom_call.1} parent=1 // pred_region
      %111 = dma.done [#allocation6], 2048
    $region57: #{tpu_custom_call.1} parent=1 // pred_fallthru
      _
    // Predicated region
    $region58: #{tpu_custom_call.1} parent=1 // pred_check
      _
    $region59: #{tpu_custom_call.1} parent=1 // pred_check_branch
      %113 = sbr.rel (0) target = $region61
    $region60: #{tpu_custom_call.1} parent=1 // pred_region
      %114 = dma.done [#allocation9], 8192
    $region61: #{tpu_custom_call.1} parent=1 // pred_fallthru
      _
    // Predicated region
    $region62: #{tpu_custom_call.1} parent=1 // pred_check
      _
    $region63: #{tpu_custom_call.1} parent=1 // pred_check_branch
      %116 = sbr.rel (0) target = $region65
    $region64: #{tpu_custom_call.1} parent=1 // pred_region
      %117 = dma.done [#allocation9], 16384
    $region65: #{tpu_custom_call.1} parent=1 // pred_fallthru
      _
    // Predicated region
    $region66: #{tpu_custom_call.1} parent=1 // pred_check
      _
    $region67: #{tpu_custom_call.1} parent=1 // pred_check_branch
      %119 = sbr.rel (0) target = $region69
    $region68: #{tpu_custom_call.1} parent=1 // pred_region
      %120 = dma.done [#allocation12], 8192
    $region69: #{tpu_custom_call.1} parent=1 // pred_fallthru
      _
    %v122 = vld [vmem:[#allocation2] sm:$0xff]
    %v123 = vld [vmem:[#allocation2 + $0x8] sm:$0xff]
    %v124 = vpack.c.bf16 %v123, %v122
    %v125 = vld [vmem:[#allocation5] sm:$0xf]
    %v126 = vld [vmem:[#allocation5 + $0x4] sm:$0xf]
    %v127 = vld [vmem:[#allocation5 + $0x8] sm:$0xf]
    %v128 = vld [vmem:[#allocation5 + $0xc] sm:$0xf]
    %v129 = vld [vmem:[#allocation5 + $0x10] sm:$0xf]
    %v130 = vld [vmem:[#allocation5 + $0x14] sm:$0xf]
    %v131 = vld [vmem:[#allocation5 + $0x18] sm:$0xf]
    %v132 = vld [vmem:[#allocation5 + $0x1c] sm:$0xf]
    %v133 = vld [vmem:[%s2] sm:$0x1]
    %v135 = vlaneseq
    %v136 = vshrl.u32 %v135, 7
    %v137 = vsub.s32 0, %v136
    %v138 = vrot.slane %v133, %v137
    %v148 = vunpack.c.l.b16 %v125
    %v149 = vunpack.c.l.b16 %v126
    %v150 = vunpack.c.l.b16 %v127
    %v151 = vunpack.c.l.b16 %v128
    %v152 = vunpack.c.l.b16 %v129
    %v153 = vunpack.c.l.b16 %v130
    %v154 = vunpack.c.l.b16 %v131
    %v155 = vunpack.c.l.b16 %v132
    %v156 = vpack.c.b16 %v149, %v148
    %v157 = vpack.c.b16 %v151, %v150
    %v158 = vpack.c.b16 %v153, %v152
    %v159 = vpack.c.b16 %v155, %v154
    %vm164 = vcmask 523264
    %v166 = vsel %vm164, %v124, 0
    %168 = vmatprep.subr.bf16.mxu0 0
    %169 = vmatpush1.bf16.msra.mxu0 %v156
    %170 = vmatprep.subr.bf16.mxu0 0
    %171 = vmatpush1.bf16.msra.mxu0 %v157
    %172 = vmatprep.subr.bf16.mxu0 0
    %173 = vmatpush1.bf16.msra.mxu0 %v158
    %174 = vmatprep.subr.bf16.mxu0 0
    %175 = vmatpush1.bf16.msra.mxu0 %v159
    %176 = vmatprep.subr.bf16.mxu0 0
    %177 = vmatpush1.bf16.msra.mxu0 0
    %178 = vmatprep.subr.bf16.mxu0 0
    %179 = vmatpush1.bf16.msra.mxu0 0
    %180 = vmatprep.subr.bf16.mxu0 0
    %181 = vmatpush1.bf16.msra.mxu0 0
    %182 = vmatprep.subr.bf16.mxu0 0
    %183 = vmatpush1.bf16.msra.mxu0 0
    %184 = vmatprep.subr.bf16.mxu0 0
    %185 = vmatpush1.bf16.msra.mxu0 0
    %186 = vmatprep.subr.bf16.mxu0 0
    %187 = vmatpush1.bf16.msra.mxu0 0
    %188 = vmatprep.subr.bf16.mxu0 0
    %189 = vmatpush1.bf16.msra.mxu0 0
    %190 = vmatprep.subr.bf16.mxu0 0
    %191 = vmatpush1.bf16.msra.mxu0 0
    %192 = vmatprep.subr.bf16.mxu0 0
    %193 = vmatpush1.bf16.msra.mxu0 0
    %194 = vmatprep.subr.bf16.mxu0 0
    %195 = vmatpush1.bf16.msra.mxu0 0
    %196 = vmatprep.subr.bf16.mxu0 0
    %197 = vmatpush1.bf16.msra.mxu0 0
    %198 = vmatprep.subr.bf16.mxu0 0
    %199 = vmatpush1.bf16.msra.mxu0 0
    %200 = vmatprep.mubr.bf16.mxu0 0
    %201 = vmatmul.mubr.bf16.gmra.mrb[0].mxu0 %v166
    %v202 = vpop.f32.mrb[0].mxu0
    %v203 = vadd.f32 %v138, %v202
    %v204 = vpop.f32.mrb[0].mxu0
    %v205 = vpop.f32.mrb[0].mxu0
    %v206 = vadd.f32 %v138, %v205
    %v207 = vpop.f32.mrb[0].mxu0
    %208 = vdwg.mxu0
    %vm209 = vcmp.gt.f32.partialorder %v203, 0.0
    %vm210 = vcmp.gt.f32.partialorder %v206, 0.0
    %v211 = vmul.f32 %v203, 0.5
    %v212 = vmul.f32 %v206, 0.5
    %v213 = vsel %vm209, %v203, %v211
    %v214 = vsel %vm210, %v206, %v212
    %v215 = vpack.c.bf16 %v214, %v213
    %v216 = vld [vmem:[#allocation7] sm:$0xff]
    %v217 = vld [vmem:[#allocation7 + $0x8] sm:$0xff]
    %v218 = vld [vmem:[#allocation7 + $0x10] sm:$0xff]
    %v219 = vld [vmem:[#allocation7 + $0x18] sm:$0xff]
    %v220 = vld [vmem:[#allocation7 + $0x20] sm:$0xff]
    %v221 = vld [vmem:[#allocation7 + $0x28] sm:$0xff]
    %v222 = vld [vmem:[#allocation7 + $0x30] sm:$0xff]
    %v223 = vld [vmem:[#allocation7 + $0x38] sm:$0xff]
    %v224 = vld [vmem:[#allocation7 + $0x40] sm:$0xff]
    %v225 = vld [vmem:[#allocation7 + $0x48] sm:$0xff]
    %v226 = vld [vmem:[#allocation7 + $0x50] sm:$0xff]
    %v227 = vld [vmem:[#allocation7 + $0x58] sm:$0xff]
    %v228 = vld [vmem:[#allocation7 + $0x60] sm:$0xff]
    %v229 = vld [vmem:[#allocation7 + $0x68] sm:$0xff]
    %v230 = vld [vmem:[#allocation7 + $0x70] sm:$0xff]
    %v231 = vld [vmem:[#allocation7 + $0x78] sm:$0xff]
    %v232 = vld [vmem:[%s4] sm:$0x3]
    %v234 = vlaneseq
    %v235 = vshrl.u32 %v234, 7
    %v236 = vsub.s32 0, %v235
    %v237 = vrot.slane %v232, %v236
    %v238 = vlaneseq
    %v239 = vshrl.u32 %v238, 7
    %v240 = vsub.s32 1, %v239
    %v241 = vrot.slane %v232, %v240
    %v260 = vunpack.c.l.b16 %v216
    %v261 = vunpack.c.h.b16 %v216
    %v262 = vunpack.c.l.b16 %v217
    %v263 = vunpack.c.h.b16 %v217
    %v264 = vunpack.c.l.b16 %v218
    %v265 = vunpack.c.h.b16 %v218
    %v266 = vunpack.c.l.b16 %v219
    %v267 = vunpack.c.h.b16 %v219
    %v268 = vunpack.c.l.b16 %v220
    %v269 = vunpack.c.h.b16 %v220
    %v270 = vunpack.c.l.b16 %v221
    %v271 = vunpack.c.h.b16 %v221
    %v272 = vunpack.c.l.b16 %v222
    %v273 = vunpack.c.h.b16 %v222
    %v274 = vunpack.c.l.b16 %v223
    %v275 = vunpack.c.h.b16 %v223
    %v276 = vunpack.c.l.b16 %v224
    %v277 = vunpack.c.h.b16 %v224
    %v278 = vunpack.c.l.b16 %v225
    %v279 = vunpack.c.h.b16 %v225
    %v280 = vunpack.c.l.b16 %v226
    %v281 = vunpack.c.h.b16 %v226
    %v282 = vunpack.c.l.b16 %v227
    %v283 = vunpack.c.h.b16 %v227
    %v284 = vunpack.c.l.b16 %v228
    %v285 = vunpack.c.h.b16 %v228
    %v286 = vunpack.c.l.b16 %v229
    %v287 = vunpack.c.h.b16 %v229
    %v288 = vunpack.c.l.b16 %v230
    %v289 = vunpack.c.h.b16 %v230
    %v290 = vunpack.c.l.b16 %v231
    %v291 = vunpack.c.h.b16 %v231
    %v292 = vpack.c.b16 %v262, %v260
    %v293 = vpack.c.b16 %v263, %v261
    %v294 = vpack.c.b16 %v266, %v264
    %v295 = vpack.c.b16 %v267, %v265
    %v296 = vpack.c.b16 %v270, %v268
    %v297 = vpack.c.b16 %v271, %v269
    %v298 = vpack.c.b16 %v274, %v272
    %v299 = vpack.c.b16 %v275, %v273
    %v300 = vpack.c.b16 %v278, %v276
    %v301 = vpack.c.b16 %v279, %v277
    %v302 = vpack.c.b16 %v282, %v280
    %v303 = vpack.c.b16 %v283, %v281
    %v304 = vpack.c.b16 %v286, %v284
    %v305 = vpack.c.b16 %v287, %v285
    %v306 = vpack.c.b16 %v290, %v288
    %v307 = vpack.c.b16 %v291, %v289
    %324 = vmatprep.subr.bf16.mxu0 %v293
    %325 = vmatpush1.bf16.msra.mxu0 %v292
    %326 = vmatprep.subr.bf16.mxu0 %v295
    %327 = vmatpush1.bf16.msra.mxu0 %v294
    %328 = vmatprep.subr.bf16.mxu0 %v297
    %329 = vmatpush1.bf16.msra.mxu0 %v296
    %330 = vmatprep.subr.bf16.mxu0 %v299
    %331 = vmatpush1.bf16.msra.mxu0 %v298
    %332 = vmatprep.subr.bf16.mxu0 %v301
    %333 = vmatpush1.bf16.msra.mxu0 %v300
    %334 = vmatprep.subr.bf16.mxu0 %v303
    %335 = vmatpush1.bf16.msra.mxu0 %v302
    %336 = vmatprep.subr.bf16.mxu0 %v305
    %337 = vmatpush1.bf16.msra.mxu0 %v304
    %338 = vmatprep.subr.bf16.mxu0 %v307
    %339 = vmatpush1.bf16.msra.mxu0 %v306
    %340 = vmatprep.subr.bf16.mxu0 0
    %341 = vmatpush1.bf16.msra.mxu0 0
    %342 = vmatprep.subr.bf16.mxu0 0
    %343 = vmatpush1.bf16.msra.mxu0 0
    %344 = vmatprep.subr.bf16.mxu0 0
    %345 = vmatpush1.bf16.msra.mxu0 0
    %346 = vmatprep.subr.bf16.mxu0 0
    %347 = vmatpush1.bf16.msra.mxu0 0
    %348 = vmatprep.subr.bf16.mxu0 0
    %349 = vmatpush1.bf16.msra.mxu0 0
    %350 = vmatprep.subr.bf16.mxu0 0
    %351 = vmatpush1.bf16.msra.mxu0 0
    %352 = vmatprep.subr.bf16.mxu0 0
    %353 = vmatpush1.bf16.msra.mxu0 0
    %354 = vmatprep.subr.bf16.mxu0 0
    %355 = vmatpush1.bf16.msra.mxu0 0
    %356 = vmatprep.mubr.bf16.mxu0 0
    %357 = vmatmul.mubr.bf16.gmra.mrb[0].mxu0 %v215
    %v358 = vpop.f32.mrb[0].mxu0
    %v359 = vadd.f32 %v237, %v358
    %v360 = vpop.f32.mrb[0].mxu0
    %v361 = vadd.f32 %v241, %v360
    %v362 = vpop.f32.mrb[0].mxu0
    %v363 = vadd.f32 %v237, %v362
    %v364 = vpop.f32.mrb[0].mxu0
    %v365 = vadd.f32 %v241, %v364
    %366 = vdwg.mxu0
    %vm367 = vcmp.gt.f32.partialorder %v359, 0.0
    %vm368 = vcmp.gt.f32.partialorder %v361, 0.0
    %vm369 = vcmp.gt.f32.partialorder %v363, 0.0
    %vm370 = vcmp.gt.f32.partialorder %v365, 0.0
    %v371 = vmul.f32 %v359, 0.5
    %v372 = vmul.f32 %v361, 0.5
    %v373 = vmul.f32 %v363, 0.5
    %v374 = vmul.f32 %v365, 0.5
    %v375 = vsel %vm367, %v359, %v371
    %v376 = vsel %vm368, %v361, %v372
    %v377 = vsel %vm369, %v363, %v373
    %v378 = vsel %vm370, %v365, %v374
    %v379 = vpack.c.bf16 %v377, %v375
    %v380 = vpack.c.bf16 %v378, %v376
    %v381 = vld [vmem:[#allocation8] sm:$0xff]
    %v382 = vld [vmem:[#allocation8 + $0x8] sm:$0xff]
    %v383 = vld [vmem:[#allocation8 + $0x10] sm:$0xff]
    %v384 = vld [vmem:[#allocation8 + $0x18] sm:$0xff]
    %v385 = vld [vmem:[#allocation8 + $0x20] sm:$0xff]
    %v386 = vld [vmem:[#allocation8 + $0x28] sm:$0xff]
    %v387 = vld [vmem:[#allocation8 + $0x30] sm:$0xff]
    %v388 = vld [vmem:[#allocation8 + $0x38] sm:$0xff]
    %v389 = vld [vmem:[#allocation8 + $0x40] sm:$0xff]
    %v390 = vld [vmem:[#allocation8 + $0x48] sm:$0xff]
    %v391 = vld [vmem:[#allocation8 + $0x50] sm:$0xff]
    %v392 = vld [vmem:[#allocation8 + $0x58] sm:$0xff]
    %v393 = vld [vmem:[#allocation8 + $0x60] sm:$0xff]
    %v394 = vld [vmem:[#allocation8 + $0x68] sm:$0xff]
    %v395 = vld [vmem:[#allocation8 + $0x70] sm:$0xff]
    %v396 = vld [vmem:[#allocation8 + $0x78] sm:$0xff]
    %v397 = vld [vmem:[#allocation8 + $0x80] sm:$0xff]
    %v398 = vld [vmem:[#allocation8 + $0x88] sm:$0xff]
    %v399 = vld [vmem:[#allocation8 + $0x90] sm:$0xff]
    %v400 = vld [vmem:[#allocation8 + $0x98] sm:$0xff]
    %v401 = vld [vmem:[#allocation8 + $0xa0] sm:$0xff]
    %v402 = vld [vmem:[#allocation8 + $0xa8] sm:$0xff]
    %v403 = vld [vmem:[#allocation8 + $0xb0] sm:$0xff]
    %v404 = vld [vmem:[#allocation8 + $0xb8] sm:$0xff]
    %v405 = vld [vmem:[#allocation8 + $0xc0] sm:$0xff]
    %v406 = vld [vmem:[#allocation8 + $0xc8] sm:$0xff]
    %v407 = vld [vmem:[#allocation8 + $0xd0] sm:$0xff]
    %v408 = vld [vmem:[#allocation8 + $0xd8] sm:$0xff]
    %v409 = vld [vmem:[#allocation8 + $0xe0] sm:$0xff]
    %v410 = vld [vmem:[#allocation8 + $0xe8] sm:$0xff]
    %v411 = vld [vmem:[#allocation8 + $0xf0] sm:$0xff]
    %v412 = vld [vmem:[#allocation8 + $0xf8] sm:$0xff]
    %v413 = vld [vmem:[#allocation8 + $0x100] sm:$0xff]
    %v414 = vld [vmem:[#allocation8 + $0x108] sm:$0xff]
    %v415 = vld [vmem:[#allocation8 + $0x110] sm:$0xff]
    %v416 = vld [vmem:[#allocation8 + $0x118] sm:$0xff]
    %v417 = vld [vmem:[#allocation8 + $0x120] sm:$0xff]
    %v418 = vld [vmem:[#allocation8 + $0x128] sm:$0xff]
    %v419 = vld [vmem:[#allocation8 + $0x130] sm:$0xff]
    %v420 = vld [vmem:[#allocation8 + $0x138] sm:$0xff]
    %v421 = vld [vmem:[#allocation8 + $0x140] sm:$0xff]
    %v422 = vld [vmem:[#allocation8 + $0x148] sm:$0xff]
    %v423 = vld [vmem:[#allocation8 + $0x150] sm:$0xff]
    %v424 = vld [vmem:[#allocation8 + $0x158] sm:$0xff]
    %v425 = vld [vmem:[#allocation8 + $0x160] sm:$0xff]
    %v426 = vld [vmem:[#allocation8 + $0x168] sm:$0xff]
    %v427 = vld [vmem:[#allocation8 + $0x170] sm:$0xff]
    %v428 = vld [vmem:[#allocation8 + $0x178] sm:$0xff]
    %v429 = vld [vmem:[#allocation8 + $0x180] sm:$0xff]
    %v430 = vld [vmem:[#allocation8 + $0x188] sm:$0xff]
    %v431 = vld [vmem:[#allocation8 + $0x190] sm:$0xff]
    %v432 = vld [vmem:[#allocation8 + $0x198] sm:$0xff]
    %v433 = vld [vmem:[#allocation8 + $0x1a0] sm:$0xff]
    %v434 = vld [vmem:[#allocation8 + $0x1a8] sm:$0xff]
    %v435 = vld [vmem:[#allocation8 + $0x1b0] sm:$0xff]
    %v436 = vld [vmem:[#allocation8 + $0x1b8] sm:$0xff]
    %v437 = vld [vmem:[#allocation8 + $0x1c0] sm:$0xff]
    %v438 = vld [vmem:[#allocation8 + $0x1c8] sm:$0xff]
    %v439 = vld [vmem:[#allocation8 + $0x1d0] sm:$0xff]
    %v440 = vld [vmem:[#allocation8 + $0x1d8] sm:$0xff]
    %v441 = vld [vmem:[#allocation8 + $0x1e0] sm:$0xff]
    %v442 = vld [vmem:[#allocation8 + $0x1e8] sm:$0xff]
    %v443 = vld [vmem:[#allocation8 + $0x1f0] sm:$0xff]
    %v444 = vld [vmem:[#allocation8 + $0x1f8] sm:$0xff]
    %v445 = vld [vmem:[%s6] sm:$0xf]
    %v447 = vlaneseq
    %v448 = vshrl.u32 %v447, 7
    %v449 = vsub.s32 0, %v448
    %v450 = vrot.slane %v445, %v449
    %v451 = vlaneseq
    %v452 = vshrl.u32 %v451, 7
    %v453 = vsub.s32 1, %v452
    %v454 = vrot.slane %v445, %v453
    %v455 = vlaneseq
    %v456 = vshrl.u32 %v455, 7
    %v457 = vsub.s32 2, %v456
    %v458 = vrot.slane %v445, %v457
    %v459 = vlaneseq
    %v460 = vshrl.u32 %v459, 7
    %v461 = vsub.s32 3, %v460
    %v462 = vrot.slane %v445, %v461
    %v531 = vunpack.c.l.b16 %v381
    %v532 = vunpack.c.h.b16 %v381
    %v533 = vunpack.c.l.b16 %v382
    %v534 = vunpack.c.h.b16 %v382
    %v535 = vunpack.c.l.b16 %v383
    %v536 = vunpack.c.h.b16 %v383
    %v537 = vunpack.c.l.b16 %v384
    %v538 = vunpack.c.h.b16 %v384
    %v539 = vunpack.c.l.b16 %v385
    %v540 = vunpack.c.h.b16 %v385
    %v541 = vunpack.c.l.b16 %v386
    %v542 = vunpack.c.h.b16 %v386
    %v543 = vunpack.c.l.b16 %v387
    %v544 = vunpack.c.h.b16 %v387
    %v545 = vunpack.c.l.b16 %v388
    %v546 = vunpack.c.h.b16 %v388
    %v547 = vunpack.c.l.b16 %v389
    %v548 = vunpack.c.h.b16 %v389
    %v549 = vunpack.c.l.b16 %v390
    %v550 = vunpack.c.h.b16 %v390
    %v551 = vunpack.c.l.b16 %v391
    %v552 = vunpack.c.h.b16 %v391
    %v553 = vunpack.c.l.b16 %v392
    %v554 = vunpack.c.h.b16 %v392
    %v555 = vunpack.c.l.b16 %v393
    %v556 = vunpack.c.h.b16 %v393
    %v557 = vunpack.c.l.b16 %v394
    %v558 = vunpack.c.h.b16 %v394
    %v559 = vunpack.c.l.b16 %v395
    %v560 = vunpack.c.h.b16 %v395
    %v561 = vunpack.c.l.b16 %v396
    %v562 = vunpack.c.h.b16 %v396
    %v563 = vunpack.c.l.b16 %v397
    %v564 = vunpack.c.h.b16 %v397
    %v565 = vunpack.c.l.b16 %v398
    %v566 = vunpack.c.h.b16 %v398
    %v567 = vunpack.c.l.b16 %v399
    %v568 = vunpack.c.h.b16 %v399
    %v569 = vunpack.c.l.b16 %v400
    %v570 = vunpack.c.h.b16 %v400
    %v571 = vunpack.c.l.b16 %v401
    %v572 = vunpack.c.h.b16 %v401
    %v573 = vunpack.c.l.b16 %v402
    %v574 = vunpack.c.h.b16 %v402
    %v575 = vunpack.c.l.b16 %v403
    %v576 = vunpack.c.h.b16 %v403
    %v577 = vunpack.c.l.b16 %v404
    %v578 = vunpack.c.h.b16 %v404
    %v579 = vunpack.c.l.b16 %v405
    %v580 = vunpack.c.h.b16 %v405
    %v581 = vunpack.c.l.b16 %v406
    %v582 = vunpack.c.h.b16 %v406
    %v583 = vunpack.c.l.b16 %v407
    %v584 = vunpack.c.h.b16 %v407
    %v585 = vunpack.c.l.b16 %v408
    %v586 = vunpack.c.h.b16 %v408
    %v587 = vunpack.c.l.b16 %v409
    %v588 = vunpack.c.h.b16 %v409
    %v589 = vunpack.c.l.b16 %v410
    %v590 = vunpack.c.h.b16 %v410
    %v591 = vunpack.c.l.b16 %v411
    %v592 = vunpack.c.h.b16 %v411
    %v593 = vunpack.c.l.b16 %v412
    %v594 = vunpack.c.h.b16 %v412
    %v595 = vunpack.c.l.b16 %v413
    %v596 = vunpack.c.h.b16 %v413
    %v597 = vunpack.c.l.b16 %v414
    %v598 = vunpack.c.h.b16 %v414
    %v599 = vunpack.c.l.b16 %v415
    %v600 = vunpack.c.h.b16 %v415
    %v601 = vunpack.c.l.b16 %v416
    %v602 = vunpack.c.h.b16 %v416
    %v603 = vunpack.c.l.b16 %v417
    %v604 = vunpack.c.h.b16 %v417
    %v605 = vunpack.c.l.b16 %v418
    %v606 = vunpack.c.h.b16 %v418
    %v607 = vunpack.c.l.b16 %v419
    %v608 = vunpack.c.h.b16 %v419
    %v609 = vunpack.c.l.b16 %v420
    %v610 = vunpack.c.h.b16 %v420
    %v611 = vunpack.c.l.b16 %v421
    %v612 = vunpack.c.h.b16 %v421
    %v613 = vunpack.c.l.b16 %v422
    %v614 = vunpack.c.h.b16 %v422
    %v615 = vunpack.c.l.b16 %v423
    %v616 = vunpack.c.h.b16 %v423
    %v617 = vunpack.c.l.b16 %v424
    %v618 = vunpack.c.h.b16 %v424
    %v619 = vunpack.c.l.b16 %v425
    %v620 = vunpack.c.h.b16 %v425
    %v621 = vunpack.c.l.b16 %v426
    %v622 = vunpack.c.h.b16 %v426
    %v623 = vunpack.c.l.b16 %v427
    %v624 = vunpack.c.h.b16 %v427
    %v625 = vunpack.c.l.b16 %v428
    %v626 = vunpack.c.h.b16 %v428
    %v627 = vunpack.c.l.b16 %v429
    %v628 = vunpack.c.h.b16 %v429
    %v629 = vunpack.c.l.b16 %v430
    %v630 = vunpack.c.h.b16 %v430
    %v631 = vunpack.c.l.b16 %v431
    %v632 = vunpack.c.h.b16 %v431
    %v633 = vunpack.c.l.b16 %v432
    %v634 = vunpack.c.h.b16 %v432
    %v635 = vunpack.c.l.b16 %v433
    %v636 = vunpack.c.h.b16 %v433
    %v637 = vunpack.c.l.b16 %v434
    %v638 = vunpack.c.h.b16 %v434
    %v639 = vunpack.c.l.b16 %v435
    %v640 = vunpack.c.h.b16 %v435
    %v641 = vunpack.c.l.b16 %v436
    %v642 = vunpack.c.h.b16 %v436
    %v643 = vunpack.c.l.b16 %v437
    %v644 = vunpack.c.h.b16 %v437
    %v645 = vunpack.c.l.b16 %v438
    %v646 = vunpack.c.h.b16 %v438
    %v647 = vunpack.c.l.b16 %v439
    %v648 = vunpack.c.h.b16 %v439
    %v649 = vunpack.c.l.b16 %v440
    %v650 = vunpack.c.h.b16 %v440
    %v651 = vunpack.c.l.b16 %v441
    %v652 = vunpack.c.h.b16 %v441
    %v653 = vunpack.c.l.b16 %v442
    %v654 = vunpack.c.h.b16 %v442
    %v655 = vunpack.c.l.b16 %v443
    %v656 = vunpack.c.h.b16 %v443
    %v657 = vunpack.c.l.b16 %v444
    %v658 = vunpack.c.h.b16 %v444
    %v659 = vpack.c.b16 %v535, %v531
    %v660 = vpack.c.b16 %v536, %v532
    %v661 = vpack.c.b16 %v537, %v533
    %v662 = vpack.c.b16 %v538, %v534
    %v663 = vpack.c.b16 %v543, %v539
    %v664 = vpack.c.b16 %v544, %v540
    %v665 = vpack.c.b16 %v545, %v541
    %v666 = vpack.c.b16 %v546, %v542
    %v667 = vpack.c.b16 %v551, %v547
    %v668 = vpack.c.b16 %v552, %v548
    %v669 = vpack.c.b16 %v553, %v549
    %v670 = vpack.c.b16 %v554, %v550
    %v671 = vpack.c.b16 %v559, %v555
    %v672 = vpack.c.b16 %v560, %v556
    %v673 = vpack.c.b16 %v561, %v557
    %v674 = vpack.c.b16 %v562, %v558
    %v675 = vpack.c.b16 %v567, %v563
    %v676 = vpack.c.b16 %v568, %v564
    %v677 = vpack.c.b16 %v569, %v565
    %v678 = vpack.c.b16 %v570, %v566
    %v679 = vpack.c.b16 %v575, %v571
    %v680 = vpack.c.b16 %v576, %v572
    %v681 = vpack.c.b16 %v577, %v573
    %v682 = vpack.c.b16 %v578, %v574
    %v683 = vpack.c.b16 %v583, %v579
    %v684 = vpack.c.b16 %v584, %v580
    %v685 = vpack.c.b16 %v585, %v581
    %v686 = vpack.c.b16 %v586, %v582
    %v687 = vpack.c.b16 %v591, %v587
    %v688 = vpack.c.b16 %v592, %v588
    %v689 = vpack.c.b16 %v593, %v589
    %v690 = vpack.c.b16 %v594, %v590
    %v691 = vpack.c.b16 %v599, %v595
    %v692 = vpack.c.b16 %v600, %v596
    %v693 = vpack.c.b16 %v601, %v597
    %v694 = vpack.c.b16 %v602, %v598
    %v695 = vpack.c.b16 %v607, %v603
    %v696 = vpack.c.b16 %v608, %v604
    %v697 = vpack.c.b16 %v609, %v605
    %v698 = vpack.c.b16 %v610, %v606
    %v699 = vpack.c.b16 %v615, %v611
    %v700 = vpack.c.b16 %v616, %v612
    %v701 = vpack.c.b16 %v617, %v613
    %v702 = vpack.c.b16 %v618, %v614
    %v703 = vpack.c.b16 %v623, %v619
    %v704 = vpack.c.b16 %v624, %v620
    %v705 = vpack.c.b16 %v625, %v621
    %v706 = vpack.c.b16 %v626, %v622
    %v707 = vpack.c.b16 %v631, %v627
    %v708 = vpack.c.b16 %v632, %v628
    %v709 = vpack.c.b16 %v633, %v629
    %v710 = vpack.c.b16 %v634, %v630
    %v711 = vpack.c.b16 %v639, %v635
    %v712 = vpack.c.b16 %v640, %v636
    %v713 = vpack.c.b16 %v641, %v637
    %v714 = vpack.c.b16 %v642, %v638
    %v715 = vpack.c.b16 %v647, %v643
    %v716 = vpack.c.b16 %v648, %v644
    %v717 = vpack.c.b16 %v649, %v645
    %v718 = vpack.c.b16 %v650, %v646
    %v719 = vpack.c.b16 %v655, %v651
    %v720 = vpack.c.b16 %v656, %v652
    %v721 = vpack.c.b16 %v657, %v653
    %v722 = vpack.c.b16 %v658, %v654
    %787 = vmatprep.subr.bf16.mxu0 %v660
    %788 = vmatpush1.bf16.msra.mxu0 %v659
    %789 = vmatprep.subr.bf16.mxu0 %v664
    %790 = vmatpush1.bf16.msra.mxu0 %v663
    %791 = vmatprep.subr.bf16.mxu0 %v668
    %792 = vmatpush1.bf16.msra.mxu0 %v667
    %793 = vmatprep.subr.bf16.mxu0 %v672
    %794 = vmatpush1.bf16.msra.mxu0 %v671
    %795 = vmatprep.subr.bf16.mxu0 %v676
    %796 = vmatpush1.bf16.msra.mxu0 %v675
    %797 = vmatprep.subr.bf16.mxu0 %v680
    %798 = vmatpush1.bf16.msra.mxu0 %v679
    %799 = vmatprep.subr.bf16.mxu0 %v684
    %800 = vmatpush1.bf16.msra.mxu0 %v683
    %801 = vmatprep.subr.bf16.mxu0 %v688
    %802 = vmatpush1.bf16.msra.mxu0 %v687
    %803 = vmatprep.subr.bf16.mxu0 %v692
    %804 = vmatpush1.bf16.msra.mxu0 %v691
    %805 = vmatprep.subr.bf16.mxu0 %v696
    %806 = vmatpush1.bf16.msra.mxu0 %v695
    %807 = vmatprep.subr.bf16.mxu0 %v700
    %808 = vmatpush1.bf16.msra.mxu0 %v699
    %809 = vmatprep.subr.bf16.mxu0 %v704
    %810 = vmatpush1.bf16.msra.mxu0 %v703
    %811 = vmatprep.subr.bf16.mxu0 %v708
    %812 = vmatpush1.bf16.msra.mxu0 %v707
    %813 = vmatprep.subr.bf16.mxu0 %v712
    %814 = vmatpush1.bf16.msra.mxu0 %v711
    %815 = vmatprep.subr.bf16.mxu0 %v716
    %816 = vmatpush1.bf16.msra.mxu0 %v715
    %817 = vmatprep.subr.bf16.mxu0 %v720
    %818 = vmatpush1.bf16.msra.mxu0 %v719
    %819 = vmatprep.mubr.bf16.mxu0 %v380
    %820 = vmatmul.mubr.bf16.gmra.mrb[0].mxu0 %v379
    %v821 = vpop.f32.mrb[0].mxu0
    %v822 = vadd.f32 %v450, %v821
    %v823 = vpop.f32.mrb[0].mxu0
    %v824 = vadd.f32 %v454, %v823
    %v825 = vpop.f32.mrb[0].mxu0
    %v826 = vadd.f32 %v450, %v825
    %v827 = vpop.f32.mrb[0].mxu0
    %v828 = vadd.f32 %v454, %v827
    %829 = vdwg.mxu0
    %830 = vmatprep.subr.bf16.mxu0 %v662
    %831 = vmatpush1.bf16.msra.mxu0 %v661
    %832 = vmatprep.subr.bf16.mxu0 %v666
    %833 = vmatpush1.bf16.msra.mxu0 %v665
    %834 = vmatprep.subr.bf16.mxu0 %v670
    %835 = vmatpush1.bf16.msra.mxu0 %v669
    %836 = vmatprep.subr.bf16.mxu0 %v674
    %837 = vmatpush1.bf16.msra.mxu0 %v673
    %838 = vmatprep.subr.bf16.mxu0 %v678
    %839 = vmatpush1.bf16.msra.mxu0 %v677
    %840 = vmatprep.subr.bf16.mxu0 %v682
    %841 = vmatpush1.bf16.msra.mxu0 %v681
    %842 = vmatprep.subr.bf16.mxu0 %v686
    %843 = vmatpush1.bf16.msra.mxu0 %v685
    %844 = vmatprep.subr.bf16.mxu0 %v690
    %845 = vmatpush1.bf16.msra.mxu0 %v689
    %846 = vmatprep.subr.bf16.mxu0 %v694
    %847 = vmatpush1.bf16.msra.mxu0 %v693
    %848 = vmatprep.subr.bf16.mxu0 %v698
    %849 = vmatpush1.bf16.msra.mxu0 %v697
    %850 = vmatprep.subr.bf16.mxu0 %v702
    %851 = vmatpush1.bf16.msra.mxu0 %v701
    %852 = vmatprep.subr.bf16.mxu0 %v706
    %853 = vmatpush1.bf16.msra.mxu0 %v705
    %854 = vmatprep.subr.bf16.mxu0 %v710
    %855 = vmatpush1.bf16.msra.mxu0 %v709
    %856 = vmatprep.subr.bf16.mxu0 %v714
    %857 = vmatpush1.bf16.msra.mxu0 %v713
    %858 = vmatprep.subr.bf16.mxu0 %v718
    %859 = vmatpush1.bf16.msra.mxu0 %v717
    %860 = vmatprep.subr.bf16.mxu0 %v722
    %861 = vmatpush1.bf16.msra.mxu0 %v721
    %862 = vmatprep.mubr.bf16.mxu0 %v380
    %863 = vmatmul.mubr.bf16.gmra.mrb[0].mxu0 %v379
    %v864 = vpop.f32.mrb[0].mxu0
    %v865 = vadd.f32 %v458, %v864
    %v866 = vpop.f32.mrb[0].mxu0
    %v867 = vadd.f32 %v462, %v866
    %v868 = vpop.f32.mrb[0].mxu0
    %v869 = vadd.f32 %v458, %v868
    %v870 = vpop.f32.mrb[0].mxu0
    %v871 = vadd.f32 %v462, %v870
    %872 = vdwg.mxu0
    %vm873 = vcmp.gt.f32.partialorder %v822, 0.0
    %vm874 = vcmp.gt.f32.partialorder %v824, 0.0
    %vm875 = vcmp.gt.f32.partialorder %v865, 0.0
    %vm876 = vcmp.gt.f32.partialorder %v867, 0.0
    %vm877 = vcmp.gt.f32.partialorder %v826, 0.0
    %vm878 = vcmp.gt.f32.partialorder %v828, 0.0
    %vm879 = vcmp.gt.f32.partialorder %v869, 0.0
    %vm880 = vcmp.gt.f32.partialorder %v871, 0.0
    %v881 = vmul.f32 %v822, 0.5
    %v882 = vmul.f32 %v824, 0.5
    %v883 = vmul.f32 %v865, 0.5
    %v884 = vmul.f32 %v867, 0.5
    %v885 = vmul.f32 %v826, 0.5
    %v886 = vmul.f32 %v828, 0.5
    %v887 = vmul.f32 %v869, 0.5
    %v888 = vmul.f32 %v871, 0.5
    %v889 = vsel %vm873, %v822, %v881
    %v890 = vsel %vm874, %v824, %v882
    %v891 = vsel %vm875, %v865, %v883
    %v892 = vsel %vm876, %v867, %v884
    %v893 = vsel %vm877, %v826, %v885
    %v894 = vsel %vm878, %v828, %v886
    %v895 = vsel %vm879, %v869, %v887
    %v896 = vsel %vm880, %v871, %v888
    %v897 = vpack.c.bf16 %v893, %v889
    %v898 = vpack.c.bf16 %v894, %v890
    %v899 = vpack.c.bf16 %v895, %v891
    %v900 = vpack.c.bf16 %v896, %v892
    %v901 = vld [vmem:[#allocation10] sm:$0xff]
    %v902 = vld [vmem:[#allocation10 + $0x8] sm:$0xff]
    %v903 = vld [vmem:[#allocation10 + $0x10] sm:$0xff]
    %v904 = vld [vmem:[#allocation10 + $0x18] sm:$0xff]
    %v905 = vld [vmem:[#allocation10 + $0x20] sm:$0xff]
    %v906 = vld [vmem:[#allocation10 + $0x28] sm:$0xff]
    %v907 = vld [vmem:[#allocation10 + $0x30] sm:$0xff]
    %v908 = vld [vmem:[#allocation10 + $0x38] sm:$0xff]
    %v909 = vld [vmem:[#allocation10 + $0x40] sm:$0xff]
    %v910 = vld [vmem:[#allocation10 + $0x48] sm:$0xff]
    %v911 = vld [vmem:[#allocation10 + $0x50] sm:$0xff]
    %v912 = vld [vmem:[#allocation10 + $0x58] sm:$0xff]
    %v913 = vld [vmem:[#allocation10 + $0x60] sm:$0xff]
    %v914 = vld [vmem:[#allocation10 + $0x68] sm:$0xff]
    %v915 = vld [vmem:[#allocation10 + $0x70] sm:$0xff]
    %v916 = vld [vmem:[#allocation10 + $0x78] sm:$0xff]
    %v917 = vld [vmem:[#allocation10 + $0x80] sm:$0xff]
    %v918 = vld [vmem:[#allocation10 + $0x88] sm:$0xff]
    %v919 = vld [vmem:[#allocation10 + $0x90] sm:$0xff]
    %v920 = vld [vmem:[#allocation10 + $0x98] sm:$0xff]
    %v921 = vld [vmem:[#allocation10 + $0xa0] sm:$0xff]
    %v922 = vld [vmem:[#allocation10 + $0xa8] sm:$0xff]
    %v923 = vld [vmem:[#allocation10 + $0xb0] sm:$0xff]
    %v924 = vld [vmem:[#allocation10 + $0xb8] sm:$0xff]
    %v925 = vld [vmem:[#allocation10 + $0xc0] sm:$0xff]
    %v926 = vld [vmem:[#allocation10 + $0xc8] sm:$0xff]
    %v927 = vld [vmem:[#allocation10 + $0xd0] sm:$0xff]
    %v928 = vld [vmem:[#allocation10 + $0xd8] sm:$0xff]
    %v929 = vld [vmem:[#allocation10 + $0xe0] sm:$0xff]
    %v930 = vld [vmem:[#allocation10 + $0xe8] sm:$0xff]
    %v931 = vld [vmem:[#allocation10 + $0xf0] sm:$0xff]
    %v932 = vld [vmem:[#allocation10 + $0xf8] sm:$0xff]
    %v933 = vld [vmem:[#allocation10 + $0x100] sm:$0xff]
    %v934 = vld [vmem:[#allocation10 + $0x108] sm:$0xff]
    %v935 = vld [vmem:[#allocation10 + $0x110] sm:$0xff]
    %v936 = vld [vmem:[#allocation10 + $0x118] sm:$0xff]
    %v937 = vld [vmem:[#allocation10 + $0x120] sm:$0xff]
    %v938 = vld [vmem:[#allocation10 + $0x128] sm:$0xff]
    %v939 = vld [vmem:[#allocation10 + $0x130] sm:$0xff]
    %v940 = vld [vmem:[#allocation10 + $0x138] sm:$0xff]
    %v941 = vld [vmem:[#allocation10 + $0x140] sm:$0xff]
    %v942 = vld [vmem:[#allocation10 + $0x148] sm:$0xff]
    %v943 = vld [vmem:[#allocation10 + $0x150] sm:$0xff]
    %v944 = vld [vmem:[#allocation10 + $0x158] sm:$0xff]
    %v945 = vld [vmem:[#allocation10 + $0x160] sm:$0xff]
    %v946 = vld [vmem:[#allocation10 + $0x168] sm:$0xff]
    %v947 = vld [vmem:[#allocation10 + $0x170] sm:$0xff]
    %v948 = vld [vmem:[#allocation10 + $0x178] sm:$0xff]
    %v949 = vld [vmem:[#allocation10 + $0x180] sm:$0xff]
    %v950 = vld [vmem:[#allocation10 + $0x188] sm:$0xff]
    %v951 = vld [vmem:[#allocation10 + $0x190] sm:$0xff]
    %v952 = vld [vmem:[#allocation10 + $0x198] sm:$0xff]
    %v953 = vld [vmem:[#allocation10 + $0x1a0] sm:$0xff]
    %v954 = vld [vmem:[#allocation10 + $0x1a8] sm:$0xff]
    %v955 = vld [vmem:[#allocation10 + $0x1b0] sm:$0xff]
    %v956 = vld [vmem:[#allocation10 + $0x1b8] sm:$0xff]
    %v957 = vld [vmem:[#allocation10 + $0x1c0] sm:$0xff]
    %v958 = vld [vmem:[#allocation10 + $0x1c8] sm:$0xff]
    %v959 = vld [vmem:[#allocation10 + $0x1d0] sm:$0xff]
    %v960 = vld [vmem:[#allocation10 + $0x1d8] sm:$0xff]
    %v961 = vld [vmem:[#allocation10 + $0x1e0] sm:$0xff]
    %v962 = vld [vmem:[#allocation10 + $0x1e8] sm:$0xff]
    %v963 = vld [vmem:[#allocation10 + $0x1f0] sm:$0xff]
    %v964 = vld [vmem:[#allocation10 + $0x1f8] sm:$0xff]
    %v965 = vld [vmem:[#allocation10 + $0x200] sm:$0xff]
    %v966 = vld [vmem:[#allocation10 + $0x208] sm:$0xff]
    %v967 = vld [vmem:[#allocation10 + $0x210] sm:$0xff]
    %v968 = vld [vmem:[#allocation10 + $0x218] sm:$0xff]
    %v969 = vld [vmem:[#allocation10 + $0x220] sm:$0xff]
    %v970 = vld [vmem:[#allocation10 + $0x228] sm:$0xff]
    %v971 = vld [vmem:[#allocation10 + $0x230] sm:$0xff]
    %v972 = vld [vmem:[#allocation10 + $0x238] sm:$0xff]
    %v973 = vld [vmem:[#allocation10 + $0x240] sm:$0xff]
    %v974 = vld [vmem:[#allocation10 + $0x248] sm:$0xff]
    %v975 = vld [vmem:[#allocation10 + $0x250] sm:$0xff]
    %v976 = vld [vmem:[#allocation10 + $0x258] sm:$0xff]
    %v977 = vld [vmem:[#allocation10 + $0x260] sm:$0xff]
    %v978 = vld [vmem:[#allocation10 + $0x268] sm:$0xff]
    %v979 = vld [vmem:[#allocation10 + $0x270] sm:$0xff]
    %v980 = vld [vmem:[#allocation10 + $0x278] sm:$0xff]
    %v981 = vld [vmem:[#allocation10 + $0x280] sm:$0xff]
    %v982 = vld [vmem:[#allocation10 + $0x288] sm:$0xff]
    %v983 = vld [vmem:[#allocation10 + $0x290] sm:$0xff]
    %v984 = vld [vmem:[#allocation10 + $0x298] sm:$0xff]
    %v985 = vld [vmem:[#allocation10 + $0x2a0] sm:$0xff]
    %v986 = vld [vmem:[#allocation10 + $0x2a8] sm:$0xff]
    %v987 = vld [vmem:[#allocation10 + $0x2b0] sm:$0xff]
    %v988 = vld [vmem:[#allocation10 + $0x2b8] sm:$0xff]
    %v989 = vld [vmem:[#allocation10 + $0x2c0] sm:$0xff]
    %v990 = vld [vmem:[#allocation10 + $0x2c8] sm:$0xff]
    %v991 = vld [vmem:[#allocation10 + $0x2d0] sm:$0xff]
    %v992 = vld [vmem:[#allocation10 + $0x2d8] sm:$0xff]
    %v993 = vld [vmem:[#allocation10 + $0x2e0] sm:$0xff]
    %v994 = vld [vmem:[#allocation10 + $0x2e8] sm:$0xff]
    %v995 = vld [vmem:[#allocation10 + $0x2f0] sm:$0xff]
    %v996 = vld [vmem:[#allocation10 + $0x2f8] sm:$0xff]
    %v997 = vld [vmem:[#allocation10 + $0x300] sm:$0xff]
    %v998 = vld [vmem:[#allocation10 + $0x308] sm:$0xff]
    %v999 = vld [vmem:[#allocation10 + $0x310] sm:$0xff]
    %v1000 = vld [vmem:[#allocation10 + $0x318] sm:$0xff]
    %v1001 = vld [vmem:[#allocation10 + $0x320] sm:$0xff]
    %v1002 = vld [vmem:[#allocation10 + $0x328] sm:$0xff]
    %v1003 = vld [vmem:[#allocation10 + $0x330] sm:$0xff]
    %v1004 = vld [vmem:[#allocation10 + $0x338] sm:$0xff]
    %v1005 = vld [vmem:[#allocation10 + $0x340] sm:$0xff]
    %v1006 = vld [vmem:[#allocation10 + $0x348] sm:$0xff]
    %v1007 = vld [vmem:[#allocation10 + $0x350] sm:$0xff]
    %v1008 = vld [vmem:[#allocation10 + $0x358] sm:$0xff]
    %v1009 = vld [vmem:[#allocation10 + $0x360] sm:$0xff]
    %v1010 = vld [vmem:[#allocation10 + $0x368] sm:$0xff]
    %v1011 = vld [vmem:[#allocation10 + $0x370] sm:$0xff]
    %v1012 = vld [vmem:[#allocation10 + $0x378] sm:$0xff]
    %v1013 = vld [vmem:[#allocation10 + $0x380] sm:$0xff]
    %v1014 = vld [vmem:[#allocation10 + $0x388] sm:$0xff]
    %v1015 = vld [vmem:[#allocation10 + $0x390] sm:$0xff]
    %v1016 = vld [vmem:[#allocation10 + $0x398] sm:$0xff]
    %v1017 = vld [vmem:[#allocation10 + $0x3a0] sm:$0xff]
    %v1018 = vld [vmem:[#allocation10 + $0x3a8] sm:$0xff]
    %v1019 = vld [vmem:[#allocation10 + $0x3b0] sm:$0xff]
    %v1020 = vld [vmem:[#allocation10 + $0x3b8] sm:$0xff]
    %v1021 = vld [vmem:[#allocation10 + $0x3c0] sm:$0xff]
    %v1022 = vld [vmem:[#allocation10 + $0x3c8] sm:$0xff]
    %v1023 = vld [vmem:[#allocation10 + $0x3d0] sm:$0xff]
    %v1024 = vld [vmem:[#allocation10 + $0x3d8] sm:$0xff]
    %v1025 = vld [vmem:[#allocation10 + $0x3e0] sm:$0xff]
    %v1026 = vld [vmem:[#allocation10 + $0x3e8] sm:$0xff]
    %v1027 = vld [vmem:[#allocation10 + $0x3f0] sm:$0xff]
    %v1028 = vld [vmem:[#allocation10 + $0x3f8] sm:$0xff]
    %v1029 = vld [vmem:[%s8] sm:$0xf]
    %v1031 = vlaneseq
    %v1032 = vshrl.u32 %v1031, 7
    %v1033 = vsub.s32 0, %v1032
    %v1034 = vrot.slane %v1029, %v1033
    %v1035 = vlaneseq
    %v1036 = vshrl.u32 %v1035, 7
    %v1037 = vsub.s32 1, %v1036
    %v1038 = vrot.slane %v1029, %v1037
    %v1039 = vlaneseq
    %v1040 = vshrl.u32 %v1039, 7
    %v1041 = vsub.s32 2, %v1040
    %v1042 = vrot.slane %v1029, %v1041
    %v1043 = vlaneseq
    %v1044 = vshrl.u32 %v1043, 7
    %v1045 = vsub.s32 3, %v1044
    %v1046 = vrot.slane %v1029, %v1045
    %v1179 = vunpack.c.l.b16 %v901
    %v1180 = vunpack.c.h.b16 %v901
    %v1181 = vunpack.c.l.b16 %v902
    %v1182 = vunpack.c.h.b16 %v902
    %v1183 = vunpack.c.l.b16 %v903
    %v1184 = vunpack.c.h.b16 %v903
    %v1185 = vunpack.c.l.b16 %v904
    %v1186 = vunpack.c.h.b16 %v904
    %v1187 = vunpack.c.l.b16 %v905
    %v1188 = vunpack.c.h.b16 %v905
    %v1189 = vunpack.c.l.b16 %v906
    %v1190 = vunpack.c.h.b16 %v906
    %v1191 = vunpack.c.l.b16 %v907
    %v1192 = vunpack.c.h.b16 %v907
    %v1193 = vunpack.c.l.b16 %v908
    %v1194 = vunpack.c.h.b16 %v908
    %v1195 = vunpack.c.l.b16 %v909
    %v1196 = vunpack.c.h.b16 %v909
    %v1197 = vunpack.c.l.b16 %v910
    %v1198 = vunpack.c.h.b16 %v910
    %v1199 = vunpack.c.l.b16 %v911
    %v1200 = vunpack.c.h.b16 %v911
    %v1201 = vunpack.c.l.b16 %v912
    %v1202 = vunpack.c.h.b16 %v912
    %v1203 = vunpack.c.l.b16 %v913
    %v1204 = vunpack.c.h.b16 %v913
    %v1205 = vunpack.c.l.b16 %v914
    %v1206 = vunpack.c.h.b16 %v914
    %v1207 = vunpack.c.l.b16 %v915
    %v1208 = vunpack.c.h.b16 %v915
    %v1209 = vunpack.c.l.b16 %v916
    %v1210 = vunpack.c.h.b16 %v916
    %v1211 = vunpack.c.l.b16 %v917
    %v1212 = vunpack.c.h.b16 %v917
    %v1213 = vunpack.c.l.b16 %v918
    %v1214 = vunpack.c.h.b16 %v918
    %v1215 = vunpack.c.l.b16 %v919
    %v1216 = vunpack.c.h.b16 %v919
    %v1217 = vunpack.c.l.b16 %v920
    %v1218 = vunpack.c.h.b16 %v920
    %v1219 = vunpack.c.l.b16 %v921
    %v1220 = vunpack.c.h.b16 %v921
    %v1221 = vunpack.c.l.b16 %v922
    %v1222 = vunpack.c.h.b16 %v922
    %v1223 = vunpack.c.l.b16 %v923
    %v1224 = vunpack.c.h.b16 %v923
    %v1225 = vunpack.c.l.b16 %v924
    %v1226 = vunpack.c.h.b16 %v924
    %v1227 = vunpack.c.l.b16 %v925
    %v1228 = vunpack.c.h.b16 %v925
    %v1229 = vunpack.c.l.b16 %v926
    %v1230 = vunpack.c.h.b16 %v926
    %v1231 = vunpack.c.l.b16 %v927
    %v1232 = vunpack.c.h.b16 %v927
    %v1233 = vunpack.c.l.b16 %v928
    %v1234 = vunpack.c.h.b16 %v928
    %v1235 = vunpack.c.l.b16 %v929
    %v1236 = vunpack.c.h.b16 %v929
    %v1237 = vunpack.c.l.b16 %v930
    %v1238 = vunpack.c.h.b16 %v930
    %v1239 = vunpack.c.l.b16 %v931
    %v1240 = vunpack.c.h.b16 %v931
    %v1241 = vunpack.c.l.b16 %v932
    %v1242 = vunpack.c.h.b16 %v932
    %v1243 = vunpack.c.l.b16 %v933
    %v1244 = vunpack.c.h.b16 %v933
    %v1245 = vunpack.c.l.b16 %v934
    %v1246 = vunpack.c.h.b16 %v934
    %v1247 = vunpack.c.l.b16 %v935
    %v1248 = vunpack.c.h.b16 %v935
    %v1249 = vunpack.c.l.b16 %v936
    %v1250 = vunpack.c.h.b16 %v936
    %v1251 = vunpack.c.l.b16 %v937
    %v1252 = vunpack.c.h.b16 %v937
    %v1253 = vunpack.c.l.b16 %v938
    %v1254 = vunpack.c.h.b16 %v938
    %v1255 = vunpack.c.l.b16 %v939
    %v1256 = vunpack.c.h.b16 %v939
    %v1257 = vunpack.c.l.b16 %v940
    %v1258 = vunpack.c.h.b16 %v940
    %v1259 = vunpack.c.l.b16 %v941
    %v1260 = vunpack.c.h.b16 %v941
    %v1261 = vunpack.c.l.b16 %v942
    %v1262 = vunpack.c.h.b16 %v942
    %v1263 = vunpack.c.l.b16 %v943
    %v1264 = vunpack.c.h.b16 %v943
    %v1265 = vunpack.c.l.b16 %v944
    %v1266 = vunpack.c.h.b16 %v944
    %v1267 = vunpack.c.l.b16 %v945
    %v1268 = vunpack.c.h.b16 %v945
    %v1269 = vunpack.c.l.b16 %v946
    %v1270 = vunpack.c.h.b16 %v946
    %v1271 = vunpack.c.l.b16 %v947
    %v1272 = vunpack.c.h.b16 %v947
    %v1273 = vunpack.c.l.b16 %v948
    %v1274 = vunpack.c.h.b16 %v948
    %v1275 = vunpack.c.l.b16 %v949
    %v1276 = vunpack.c.h.b16 %v949
    %v1277 = vunpack.c.l.b16 %v950
    %v1278 = vunpack.c.h.b16 %v950
    %v1279 = vunpack.c.l.b16 %v951
    %v1280 = vunpack.c.h.b16 %v951
    %v1281 = vunpack.c.l.b16 %v952
    %v1282 = vunpack.c.h.b16 %v952
    %v1283 = vunpack.c.l.b16 %v953
    %v1284 = vunpack.c.h.b16 %v953
    %v1285 = vunpack.c.l.b16 %v954
    %v1286 = vunpack.c.h.b16 %v954
    %v1287 = vunpack.c.l.b16 %v955
    %v1288 = vunpack.c.h.b16 %v955
    %v1289 = vunpack.c.l.b16 %v956
    %v1290 = vunpack.c.h.b16 %v956
    %v1291 = vunpack.c.l.b16 %v957
    %v1292 = vunpack.c.h.b16 %v957
    %v1293 = vunpack.c.l.b16 %v958
    %v1294 = vunpack.c.h.b16 %v958
    %v1295 = vunpack.c.l.b16 %v959
    %v1296 = vunpack.c.h.b16 %v959
    %v1297 = vunpack.c.l.b16 %v960
    %v1298 = vunpack.c.h.b16 %v960
    %v1299 = vunpack.c.l.b16 %v961
    %v1300 = vunpack.c.h.b16 %v961
    %v1301 = vunpack.c.l.b16 %v962
    %v1302 = vunpack.c.h.b16 %v962
    %v1303 = vunpack.c.l.b16 %v963
    %v1304 = vunpack.c.h.b16 %v963
    %v1305 = vunpack.c.l.b16 %v964
    %v1306 = vunpack.c.h.b16 %v964
    %v1307 = vunpack.c.l.b16 %v965
    %v1308 = vunpack.c.h.b16 %v965
    %v1309 = vunpack.c.l.b16 %v966
    %v1310 = vunpack.c.h.b16 %v966
    %v1311 = vunpack.c.l.b16 %v967
    %v1312 = vunpack.c.h.b16 %v967
    %v1313 = vunpack.c.l.b16 %v968
    %v1314 = vunpack.c.h.b16 %v968
    %v1315 = vunpack.c.l.b16 %v969
    %v1316 = vunpack.c.h.b16 %v969
    %v1317 = vunpack.c.l.b16 %v970
    %v1318 = vunpack.c.h.b16 %v970
    %v1319 = vunpack.c.l.b16 %v971
    %v1320 = vunpack.c.h.b16 %v971
    %v1321 = vunpack.c.l.b16 %v972
    %v1322 = vunpack.c.h.b16 %v972
    %v1323 = vunpack.c.l.b16 %v973
    %v1324 = vunpack.c.h.b16 %v973
    %v1325 = vunpack.c.l.b16 %v974
    %v1326 = vunpack.c.h.b16 %v974
    %v1327 = vunpack.c.l.b16 %v975
    %v1328 = vunpack.c.h.b16 %v975
    %v1329 = vunpack.c.l.b16 %v976
    %v1330 = vunpack.c.h.b16 %v976
    %v1331 = vunpack.c.l.b16 %v977
    %v1332 = vunpack.c.h.b16 %v977
    %v1333 = vunpack.c.l.b16 %v978
    %v1334 = vunpack.c.h.b16 %v978
    %v1335 = vunpack.c.l.b16 %v979
    %v1336 = vunpack.c.h.b16 %v979
    %v1337 = vunpack.c.l.b16 %v980
    %v1338 = vunpack.c.h.b16 %v980
    %v1339 = vunpack.c.l.b16 %v981
    %v1340 = vunpack.c.h.b16 %v981
    %v1341 = vunpack.c.l.b16 %v982
    %v1342 = vunpack.c.h.b16 %v982
    %v1343 = vunpack.c.l.b16 %v983
    %v1344 = vunpack.c.h.b16 %v983
    %v1345 = vunpack.c.l.b16 %v984
    %v1346 = vunpack.c.h.b16 %v984
    %v1347 = vunpack.c.l.b16 %v985
    %v1348 = vunpack.c.h.b16 %v985
    %v1349 = vunpack.c.l.b16 %v986
    %v1350 = vunpack.c.h.b16 %v986
    %v1351 = vunpack.c.l.b16 %v987
    %v1352 = vunpack.c.h.b16 %v987
    %v1353 = vunpack.c.l.b16 %v988
    %v1354 = vunpack.c.h.b16 %v988
    %v1355 = vunpack.c.l.b16 %v989
    %v1356 = vunpack.c.h.b16 %v989
    %v1357 = vunpack.c.l.b16 %v990
    %v1358 = vunpack.c.h.b16 %v990
    %v1359 = vunpack.c.l.b16 %v991
    %v1360 = vunpack.c.h.b16 %v991
    %v1361 = vunpack.c.l.b16 %v992
    %v1362 = vunpack.c.h.b16 %v992
    %v1363 = vunpack.c.l.b16 %v993
    %v1364 = vunpack.c.h.b16 %v993
    %v1365 = vunpack.c.l.b16 %v994
    %v1366 = vunpack.c.h.b16 %v994
    %v1367 = vunpack.c.l.b16 %v995
    %v1368 = vunpack.c.h.b16 %v995
    %v1369 = vunpack.c.l.b16 %v996
    %v1370 = vunpack.c.h.b16 %v996
    %v1371 = vunpack.c.l.b16 %v997
    %v1372 = vunpack.c.h.b16 %v997
    %v1373 = vunpack.c.l.b16 %v998
    %v1374 = vunpack.c.h.b16 %v998
    %v1375 = vunpack.c.l.b16 %v999
    %v1376 = vunpack.c.h.b16 %v999
    %v1377 = vunpack.c.l.b16 %v1000
    %v1378 = vunpack.c.h.b16 %v1000
    %v1379 = vunpack.c.l.b16 %v1001
    %v1380 = vunpack.c.h.b16 %v1001
    %v1381 = vunpack.c.l.b16 %v1002
    %v1382 = vunpack.c.h.b16 %v1002
    %v1383 = vunpack.c.l.b16 %v1003
    %v1384 = vunpack.c.h.b16 %v1003
    %v1385 = vunpack.c.l.b16 %v1004
    %v1386 = vunpack.c.h.b16 %v1004
    %v1387 = vunpack.c.l.b16 %v1005
    %v1388 = vunpack.c.h.b16 %v1005
    %v1389 = vunpack.c.l.b16 %v1006
    %v1390 = vunpack.c.h.b16 %v1006
    %v1391 = vunpack.c.l.b16 %v1007
    %v1392 = vunpack.c.h.b16 %v1007
    %v1393 = vunpack.c.l.b16 %v1008
    %v1394 = vunpack.c.h.b16 %v1008
    %v1395 = vunpack.c.l.b16 %v1009
    %v1396 = vunpack.c.h.b16 %v1009
    %v1397 = vunpack.c.l.b16 %v1010
    %v1398 = vunpack.c.h.b16 %v1010
    %v1399 = vunpack.c.l.b16 %v1011
    %v1400 = vunpack.c.h.b16 %v1011
    %v1401 = vunpack.c.l.b16 %v1012
    %v1402 = vunpack.c.h.b16 %v1012
    %v1403 = vunpack.c.l.b16 %v1013
    %v1404 = vunpack.c.h.b16 %v1013
    %v1405 = vunpack.c.l.b16 %v1014
    %v1406 = vunpack.c.h.b16 %v1014
    %v1407 = vunpack.c.l.b16 %v1015
    %v1408 = vunpack.c.h.b16 %v1015
    %v1409 = vunpack.c.l.b16 %v1016
    %v1410 = vunpack.c.h.b16 %v1016
    %v1411 = vunpack.c.l.b16 %v1017
    %v1412 = vunpack.c.h.b16 %v1017
    %v1413 = vunpack.c.l.b16 %v1018
    %v1414 = vunpack.c.h.b16 %v1018
    %v1415 = vunpack.c.l.b16 %v1019
    %v1416 = vunpack.c.h.b16 %v1019
    %v1417 = vunpack.c.l.b16 %v1020
    %v1418 = vunpack.c.h.b16 %v1020
    %v1419 = vunpack.c.l.b16 %v1021
    %v1420 = vunpack.c.h.b16 %v1021
    %v1421 = vunpack.c.l.b16 %v1022
    %v1422 = vunpack.c.h.b16 %v1022
    %v1423 = vunpack.c.l.b16 %v1023
    %v1424 = vunpack.c.h.b16 %v1023
    %v1425 = vunpack.c.l.b16 %v1024
    %v1426 = vunpack.c.h.b16 %v1024
    %v1427 = vunpack.c.l.b16 %v1025
    %v1428 = vunpack.c.h.b16 %v1025
    %v1429 = vunpack.c.l.b16 %v1026
    %v1430 = vunpack.c.h.b16 %v1026
    %v1431 = vunpack.c.l.b16 %v1027
    %v1432 = vunpack.c.h.b16 %v1027
    %v1433 = vunpack.c.l.b16 %v1028
    %v1434 = vunpack.c.h.b16 %v1028
    %v1435 = vpack.c.b16 %v1183, %v1179
    %v1436 = vpack.c.b16 %v1184, %v1180
    %v1437 = vpack.c.b16 %v1185, %v1181
    %v1438 = vpack.c.b16 %v1186, %v1182
    %v1439 = vpack.c.b16 %v1191, %v1187
    %v1440 = vpack.c.b16 %v1192, %v1188
    %v1441 = vpack.c.b16 %v1193, %v1189
    %v1442 = vpack.c.b16 %v1194, %v1190
    %v1443 = vpack.c.b16 %v1199, %v1195
    %v1444 = vpack.c.b16 %v1200, %v1196
    %v1445 = vpack.c.b16 %v1201, %v1197
    %v1446 = vpack.c.b16 %v1202, %v1198
    %v1447 = vpack.c.b16 %v1207, %v1203
    %v1448 = vpack.c.b16 %v1208, %v1204
    %v1449 = vpack.c.b16 %v1209, %v1205
    %v1450 = vpack.c.b16 %v1210, %v1206
    %v1451 = vpack.c.b16 %v1215, %v1211
    %v1452 = vpack.c.b16 %v1216, %v1212
    %v1453 = vpack.c.b16 %v1217, %v1213
    %v1454 = vpack.c.b16 %v1218, %v1214
    %v1455 = vpack.c.b16 %v1223, %v1219
    %v1456 = vpack.c.b16 %v1224, %v1220
    %v1457 = vpack.c.b16 %v1225, %v1221
    %v1458 = vpack.c.b16 %v1226, %v1222
    %v1459 = vpack.c.b16 %v1231, %v1227
    %v1460 = vpack.c.b16 %v1232, %v1228
    %v1461 = vpack.c.b16 %v1233, %v1229
    %v1462 = vpack.c.b16 %v1234, %v1230
    %v1463 = vpack.c.b16 %v1239, %v1235
    %v1464 = vpack.c.b16 %v1240, %v1236
    %v1465 = vpack.c.b16 %v1241, %v1237
    %v1466 = vpack.c.b16 %v1242, %v1238
    %v1467 = vpack.c.b16 %v1247, %v1243
    %v1468 = vpack.c.b16 %v1248, %v1244
    %v1469 = vpack.c.b16 %v1249, %v1245
    %v1470 = vpack.c.b16 %v1250, %v1246
    %v1471 = vpack.c.b16 %v1255, %v1251
    %v1472 = vpack.c.b16 %v1256, %v1252
    %v1473 = vpack.c.b16 %v1257, %v1253
    %v1474 = vpack.c.b16 %v1258, %v1254
    %v1475 = vpack.c.b16 %v1263, %v1259
    %v1476 = vpack.c.b16 %v1264, %v1260
    %v1477 = vpack.c.b16 %v1265, %v1261
    %v1478 = vpack.c.b16 %v1266, %v1262
    %v1479 = vpack.c.b16 %v1271, %v1267
    %v1480 = vpack.c.b16 %v1272, %v1268
    %v1481 = vpack.c.b16 %v1273, %v1269
    %v1482 = vpack.c.b16 %v1274, %v1270
    %v1483 = vpack.c.b16 %v1279, %v1275
    %v1484 = vpack.c.b16 %v1280, %v1276
    %v1485 = vpack.c.b16 %v1281, %v1277
    %v1486 = vpack.c.b16 %v1282, %v1278
    %v1487 = vpack.c.b16 %v1287, %v1283
    %v1488 = vpack.c.b16 %v1288, %v1284
    %v1489 = vpack.c.b16 %v1289, %v1285
    %v1490 = vpack.c.b16 %v1290, %v1286
    %v1491 = vpack.c.b16 %v1295, %v1291
    %v1492 = vpack.c.b16 %v1296, %v1292
    %v1493 = vpack.c.b16 %v1297, %v1293
    %v1494 = vpack.c.b16 %v1298, %v1294
    %v1495 = vpack.c.b16 %v1303, %v1299
    %v1496 = vpack.c.b16 %v1304, %v1300
    %v1497 = vpack.c.b16 %v1305, %v1301
    %v1498 = vpack.c.b16 %v1306, %v1302
    %v1499 = vpack.c.b16 %v1311, %v1307
    %v1500 = vpack.c.b16 %v1312, %v1308
    %v1501 = vpack.c.b16 %v1313, %v1309
    %v1502 = vpack.c.b16 %v1314, %v1310
    %v1503 = vpack.c.b16 %v1319, %v1315
    %v1504 = vpack.c.b16 %v1320, %v1316
    %v1505 = vpack.c.b16 %v1321, %v1317
    %v1506 = vpack.c.b16 %v1322, %v1318
    %v1507 = vpack.c.b16 %v1327, %v1323
    %v1508 = vpack.c.b16 %v1328, %v1324
    %v1509 = vpack.c.b16 %v1329, %v1325
    %v1510 = vpack.c.b16 %v1330, %v1326
    %v1511 = vpack.c.b16 %v1335, %v1331
    %v1512 = vpack.c.b16 %v1336, %v1332
    %v1513 = vpack.c.b16 %v1337, %v1333
    %v1514 = vpack.c.b16 %v1338, %v1334
    %v1515 = vpack.c.b16 %v1343, %v1339
    %v1516 = vpack.c.b16 %v1344, %v1340
    %v1517 = vpack.c.b16 %v1345, %v1341
    %v1518 = vpack.c.b16 %v1346, %v1342
    %v1519 = vpack.c.b16 %v1351, %v1347
    %v1520 = vpack.c.b16 %v1352, %v1348
    %v1521 = vpack.c.b16 %v1353, %v1349
    %v1522 = vpack.c.b16 %v1354, %v1350
    %v1523 = vpack.c.b16 %v1359, %v1355
    %v1524 = vpack.c.b16 %v1360, %v1356
    %v1525 = vpack.c.b16 %v1361, %v1357
    %v1526 = vpack.c.b16 %v1362, %v1358
    %v1527 = vpack.c.b16 %v1367, %v1363
    %v1528 = vpack.c.b16 %v1368, %v1364
    %v1529 = vpack.c.b16 %v1369, %v1365
    %v1530 = vpack.c.b16 %v1370, %v1366
    %v1531 = vpack.c.b16 %v1375, %v1371
    %v1532 = vpack.c.b16 %v1376, %v1372
    %v1533 = vpack.c.b16 %v1377, %v1373
    %v1534 = vpack.c.b16 %v1378, %v1374
    %v1535 = vpack.c.b16 %v1383, %v1379
    %v1536 = vpack.c.b16 %v1384, %v1380
    %v1537 = vpack.c.b16 %v1385, %v1381
    %v1538 = vpack.c.b16 %v1386, %v1382
    %v1539 = vpack.c.b16 %v1391, %v1387
    %v1540 = vpack.c.b16 %v1392, %v1388
    %v1541 = vpack.c.b16 %v1393, %v1389
    %v1542 = vpack.c.b16 %v1394, %v1390
    %v1543 = vpack.c.b16 %v1399, %v1395
    %v1544 = vpack.c.b16 %v1400, %v1396
    %v1545 = vpack.c.b16 %v1401, %v1397
    %v1546 = vpack.c.b16 %v1402, %v1398
    %v1547 = vpack.c.b16 %v1407, %v1403
    %v1548 = vpack.c.b16 %v1408, %v1404
    %v1549 = vpack.c.b16 %v1409, %v1405
    %v1550 = vpack.c.b16 %v1410, %v1406
    %v1551 = vpack.c.b16 %v1415, %v1411
    %v1552 = vpack.c.b16 %v1416, %v1412
    %v1553 = vpack.c.b16 %v1417, %v1413
    %v1554 = vpack.c.b16 %v1418, %v1414
    %v1555 = vpack.c.b16 %v1423, %v1419
    %v1556 = vpack.c.b16 %v1424, %v1420
    %v1557 = vpack.c.b16 %v1425, %v1421
    %v1558 = vpack.c.b16 %v1426, %v1422
    %v1559 = vpack.c.b16 %v1431, %v1427
    %v1560 = vpack.c.b16 %v1432, %v1428
    %v1561 = vpack.c.b16 %v1433, %v1429
    %v1562 = vpack.c.b16 %v1434, %v1430
    %1691 = vmatprep.subr.bf16.mxu0 %v1436
    %1692 = vmatpush1.bf16.msra.mxu0 %v1435
    %1693 = vmatprep.subr.bf16.mxu0 %v1440
    %1694 = vmatpush1.bf16.msra.mxu0 %v1439
    %1695 = vmatprep.subr.bf16.mxu0 %v1444
    %1696 = vmatpush1.bf16.msra.mxu0 %v1443
    %1697 = vmatprep.subr.bf16.mxu0 %v1448
    %1698 = vmatpush1.bf16.msra.mxu0 %v1447
    %1699 = vmatprep.subr.bf16.mxu0 %v1452
    %1700 = vmatpush1.bf16.msra.mxu0 %v1451
    %1701 = vmatprep.subr.bf16.mxu0 %v1456
    %1702 = vmatpush1.bf16.msra.mxu0 %v1455
    %1703 = vmatprep.subr.bf16.mxu0 %v1460
    %1704 = vmatpush1.bf16.msra.mxu0 %v1459
    %1705 = vmatprep.subr.bf16.mxu0 %v1464
    %1706 = vmatpush1.bf16.msra.mxu0 %v1463
    %1707 = vmatprep.subr.bf16.mxu0 %v1468
    %1708 = vmatpush1.bf16.msra.mxu0 %v1467
    %1709 = vmatprep.subr.bf16.mxu0 %v1472
    %1710 = vmatpush1.bf16.msra.mxu0 %v1471
    %1711 = vmatprep.subr.bf16.mxu0 %v1476
    %1712 = vmatpush1.bf16.msra.mxu0 %v1475
    %1713 = vmatprep.subr.bf16.mxu0 %v1480
    %1714 = vmatpush1.bf16.msra.mxu0 %v1479
    %1715 = vmatprep.subr.bf16.mxu0 %v1484
    %1716 = vmatpush1.bf16.msra.mxu0 %v1483
    %1717 = vmatprep.subr.bf16.mxu0 %v1488
    %1718 = vmatpush1.bf16.msra.mxu0 %v1487
    %1719 = vmatprep.subr.bf16.mxu0 %v1492
    %1720 = vmatpush1.bf16.msra.mxu0 %v1491
    %1721 = vmatprep.subr.bf16.mxu0 %v1496
    %1722 = vmatpush1.bf16.msra.mxu0 %v1495
    %1723 = vmatprep.mubr.bf16.mxu0 %v898
    %1724 = vmatmul.mubr.bf16.gmra.mrb[0].mxu0 %v897
    %v1725 = vpop.f32.mrb[0].mxu0
    %v1726 = vadd.f32 %v1034, %v1725
    %v1727 = vpop.f32.mrb[0].mxu0
    %v1728 = vadd.f32 %v1038, %v1727
    %v1729 = vpop.f32.mrb[0].mxu0
    %v1730 = vadd.f32 %v1034, %v1729
    %v1731 = vpop.f32.mrb[0].mxu0
    %v1732 = vadd.f32 %v1038, %v1731
    %1733 = vdwg.mxu0
    %1734 = vmatprep.subr.bf16.mxu0 %v1500
    %1735 = vmatpush1.bf16.msra.mxu0 %v1499
    %1736 = vmatprep.subr.bf16.mxu0 %v1504
    %1737 = vmatpush1.bf16.msra.mxu0 %v1503
    %1738 = vmatprep.subr.bf16.mxu0 %v1508
    %1739 = vmatpush1.bf16.msra.mxu0 %v1507
    %1740 = vmatprep.subr.bf16.mxu0 %v1512
    %1741 = vmatpush1.bf16.msra.mxu0 %v1511
    %1742 = vmatprep.subr.bf16.mxu0 %v1516
    %1743 = vmatpush1.bf16.msra.mxu0 %v1515
    %1744 = vmatprep.subr.bf16.mxu0 %v1520
    %1745 = vmatpush1.bf16.msra.mxu0 %v1519
    %1746 = vmatprep.subr.bf16.mxu0 %v1524
    %1747 = vmatpush1.bf16.msra.mxu0 %v1523
    %1748 = vmatprep.subr.bf16.mxu0 %v1528
    %1749 = vmatpush1.bf16.msra.mxu0 %v1527
    %1750 = vmatprep.subr.bf16.mxu0 %v1532
    %1751 = vmatpush1.bf16.msra.mxu0 %v1531
    %1752 = vmatprep.subr.bf16.mxu0 %v1536
    %1753 = vmatpush1.bf16.msra.mxu0 %v1535
    %1754 = vmatprep.subr.bf16.mxu0 %v1540
    %1755 = vmatpush1.bf16.msra.mxu0 %v1539
    %1756 = vmatprep.subr.bf16.mxu0 %v1544
    %1757 = vmatpush1.bf16.msra.mxu0 %v1543
    %1758 = vmatprep.subr.bf16.mxu0 %v1548
    %1759 = vmatpush1.bf16.msra.mxu0 %v1547
    %1760 = vmatprep.subr.bf16.mxu0 %v1552
    %1761 = vmatpush1.bf16.msra.mxu0 %v1551
    %1762 = vmatprep.subr.bf16.mxu0 %v1556
    %1763 = vmatpush1.bf16.msra.mxu0 %v1555
    %1764 = vmatprep.subr.bf16.mxu0 %v1560
    %1765 = vmatpush1.bf16.msra.mxu0 %v1559
    %1766 = vmatprep.mubr.bf16.mxu0 %v900
    %1767 = vmatmul.mubr.bf16.gmra.mrb[0].mxu0 %v899
    %v1768 = vpop.f32.mrb[0].mxu0
    %v1769 = vadd.f32 %v1726, %v1768
    %v1770 = vpop.f32.mrb[0].mxu0
    %v1771 = vadd.f32 %v1728, %v1770
    %v1772 = vpop.f32.mrb[0].mxu0
    %v1773 = vadd.f32 %v1730, %v1772
    %v1774 = vpop.f32.mrb[0].mxu0
    %v1775 = vadd.f32 %v1732, %v1774
    %1776 = vdwg.mxu0
    %1777 = vmatprep.subr.bf16.mxu0 %v1438
    %1778 = vmatpush1.bf16.msra.mxu0 %v1437
    %1779 = vmatprep.subr.bf16.mxu0 %v1442
    %1780 = vmatpush1.bf16.msra.mxu0 %v1441
    %1781 = vmatprep.subr.bf16.mxu0 %v1446
    %1782 = vmatpush1.bf16.msra.mxu0 %v1445
    %1783 = vmatprep.subr.bf16.mxu0 %v1450
    %1784 = vmatpush1.bf16.msra.mxu0 %v1449
    %1785 = vmatprep.subr.bf16.mxu0 %v1454
    %1786 = vmatpush1.bf16.msra.mxu0 %v1453
    %1787 = vmatprep.subr.bf16.mxu0 %v1458
    %1788 = vmatpush1.bf16.msra.mxu0 %v1457
    %1789 = vmatprep.subr.bf16.mxu0 %v1462
    %1790 = vmatpush1.bf16.msra.mxu0 %v1461
    %1791 = vmatprep.subr.bf16.mxu0 %v1466
    %1792 = vmatpush1.bf16.msra.mxu0 %v1465
    %1793 = vmatprep.subr.bf16.mxu0 %v1470
    %1794 = vmatpush1.bf16.msra.mxu0 %v1469
    %1795 = vmatprep.subr.bf16.mxu0 %v1474
    %1796 = vmatpush1.bf16.msra.mxu0 %v1473
    %1797 = vmatprep.subr.bf16.mxu0 %v1478
    %1798 = vmatpush1.bf16.msra.mxu0 %v1477
    %1799 = vmatprep.subr.bf16.mxu0 %v1482
    %1800 = vmatpush1.bf16.msra.mxu0 %v1481
    %1801 = vmatprep.subr.bf16.mxu0 %v1486
    %1802 = vmatpush1.bf16.msra.mxu0 %v1485
    %1803 = vmatprep.subr.bf16.mxu0 %v1490
    %1804 = vmatpush1.bf16.msra.mxu0 %v1489
    %1805 = vmatprep.subr.bf16.mxu0 %v1494
    %1806 = vmatpush1.bf16.msra.mxu0 %v1493
    %1807 = vmatprep.subr.bf16.mxu0 %v1498
    %1808 = vmatpush1.bf16.msra.mxu0 %v1497
    %1809 = vmatprep.mubr.bf16.mxu0 %v898
    %1810 = vmatmul.mubr.bf16.gmra.mrb[0].mxu0 %v897
    %v1811 = vpop.f32.mrb[0].mxu0
    %v1812 = vadd.f32 %v1042, %v1811
    %v1813 = vpop.f32.mrb[0].mxu0
    %v1814 = vadd.f32 %v1046, %v1813
    %v1815 = vpop.f32.mrb[0].mxu0
    %v1816 = vadd.f32 %v1042, %v1815
    %v1817 = vpop.f32.mrb[0].mxu0
    %v1818 = vadd.f32 %v1046, %v1817
    %1819 = vdwg.mxu0
    %1820 = vmatprep.subr.bf16.mxu0 %v1502
    %1821 = vmatpush1.bf16.msra.mxu0 %v1501
    %1822 = vmatprep.subr.bf16.mxu0 %v1506
    %1823 = vmatpush1.bf16.msra.mxu0 %v1505
    %1824 = vmatprep.subr.bf16.mxu0 %v1510
    %1825 = vmatpush1.bf16.msra.mxu0 %v1509
    %1826 = vmatprep.subr.bf16.mxu0 %v1514
    %1827 = vmatpush1.bf16.msra.mxu0 %v1513
    %1828 = vmatprep.subr.bf16.mxu0 %v1518
    %1829 = vmatpush1.bf16.msra.mxu0 %v1517
    %1830 = vmatprep.subr.bf16.mxu0 %v1522
    %1831 = vmatpush1.bf16.msra.mxu0 %v1521
    %1832 = vmatprep.subr.bf16.mxu0 %v1526
    %1833 = vmatpush1.bf16.msra.mxu0 %v1525
    %1834 = vmatprep.subr.bf16.mxu0 %v1530
    %1835 = vmatpush1.bf16.msra.mxu0 %v1529
    %1836 = vmatprep.subr.bf16.mxu0 %v1534
    %1837 = vmatpush1.bf16.msra.mxu0 %v1533
    %1838 = vmatprep.subr.bf16.mxu0 %v1538
    %1839 = vmatpush1.bf16.msra.mxu0 %v1537
    %1840 = vmatprep.subr.bf16.mxu0 %v1542
    %1841 = vmatpush1.bf16.msra.mxu0 %v1541
    %1842 = vmatprep.subr.bf16.mxu0 %v1546
    %1843 = vmatpush1.bf16.msra.mxu0 %v1545
    %1844 = vmatprep.subr.bf16.mxu0 %v1550
    %1845 = vmatpush1.bf16.msra.mxu0 %v1549
    %1846 = vmatprep.subr.bf16.mxu0 %v1554
    %1847 = vmatpush1.bf16.msra.mxu0 %v1553
    %1848 = vmatprep.subr.bf16.mxu0 %v1558
    %1849 = vmatpush1.bf16.msra.mxu0 %v1557
    %1850 = vmatprep.subr.bf16.mxu0 %v1562
    %1851 = vmatpush1.bf16.msra.mxu0 %v1561
    %1852 = vmatprep.mubr.bf16.mxu0 %v900
    %1853 = vmatmul.mubr.bf16.gmra.mrb[0].mxu0 %v899
    %v1854 = vpop.f32.mrb[0].mxu0
    %v1855 = vadd.f32 %v1812, %v1854
    %v1856 = vpop.f32.mrb[0].mxu0
    %v1857 = vadd.f32 %v1814, %v1856
    %v1858 = vpop.f32.mrb[0].mxu0
    %v1859 = vadd.f32 %v1816, %v1858
    %v1860 = vpop.f32.mrb[0].mxu0
    %v1861 = vadd.f32 %v1818, %v1860
    %1862 = vdwg.mxu0
    %vm1863 = vcmp.gt.f32.partialorder %v1769, 0.0
    %vm1864 = vcmp.gt.f32.partialorder %v1771, 0.0
    %vm1865 = vcmp.gt.f32.partialorder %v1855, 0.0
    %vm1866 = vcmp.gt.f32.partialorder %v1857, 0.0
    %vm1867 = vcmp.gt.f32.partialorder %v1773, 0.0
    %vm1868 = vcmp.gt.f32.partialorder %v1775, 0.0
    %vm1869 = vcmp.gt.f32.partialorder %v1859, 0.0
    %vm1870 = vcmp.gt.f32.partialorder %v1861, 0.0
    %v1871 = vmul.f32 %v1769, 0.5
    %v1872 = vmul.f32 %v1771, 0.5
    %v1873 = vmul.f32 %v1855, 0.5
    %v1874 = vmul.f32 %v1857, 0.5
    %v1875 = vmul.f32 %v1773, 0.5
    %v1876 = vmul.f32 %v1775, 0.5
    %v1877 = vmul.f32 %v1859, 0.5
    %v1878 = vmul.f32 %v1861, 0.5
    %v1879 = vsel %vm1863, %v1769, %v1871
    %v1880 = vsel %vm1864, %v1771, %v1872
    %v1881 = vsel %vm1865, %v1855, %v1873
    %v1882 = vsel %vm1866, %v1857, %v1874
    %v1883 = vsel %vm1867, %v1773, %v1875
    %v1884 = vsel %vm1868, %v1775, %v1876
    %v1885 = vsel %vm1869, %v1859, %v1877
    %v1886 = vsel %vm1870, %v1861, %v1878
    %v1887 = vpack.c.bf16 %v1883, %v1879
    %v1888 = vpack.c.bf16 %v1884, %v1880
    %v1889 = vpack.c.bf16 %v1885, %v1881
    %v1890 = vpack.c.bf16 %v1886, %v1882
    %v1891 = vld [vmem:[#allocation11] sm:$0xff]
    %v1892 = vld [vmem:[#allocation11 + $0x8] sm:$0xff]
    %v1893 = vld [vmem:[#allocation11 + $0x10] sm:$0xff]
    %v1894 = vld [vmem:[#allocation11 + $0x18] sm:$0xff]
    %v1895 = vld [vmem:[#allocation11 + $0x20] sm:$0xff]
    %v1896 = vld [vmem:[#allocation11 + $0x28] sm:$0xff]
    %v1897 = vld [vmem:[#allocation11 + $0x30] sm:$0xff]
    %v1898 = vld [vmem:[#allocation11 + $0x38] sm:$0xff]
    %v1899 = vld [vmem:[#allocation11 + $0x40] sm:$0xff]
    %v1900 = vld [vmem:[#allocation11 + $0x48] sm:$0xff]
    %v1901 = vld [vmem:[#allocation11 + $0x50] sm:$0xff]
    %v1902 = vld [vmem:[#allocation11 + $0x58] sm:$0xff]
    %v1903 = vld [vmem:[#allocation11 + $0x60] sm:$0xff]
    %v1904 = vld [vmem:[#allocation11 + $0x68] sm:$0xff]
    %v1905 = vld [vmem:[#allocation11 + $0x70] sm:$0xff]
    %v1906 = vld [vmem:[#allocation11 + $0x78] sm:$0xff]
    %v1907 = vld [vmem:[#allocation11 + $0x80] sm:$0xff]
    %v1908 = vld [vmem:[#allocation11 + $0x88] sm:$0xff]
    %v1909 = vld [vmem:[#allocation11 + $0x90] sm:$0xff]
    %v1910 = vld [vmem:[#allocation11 + $0x98] sm:$0xff]
    %v1911 = vld [vmem:[#allocation11 + $0xa0] sm:$0xff]
    %v1912 = vld [vmem:[#allocation11 + $0xa8] sm:$0xff]
    %v1913 = vld [vmem:[#allocation11 + $0xb0] sm:$0xff]
    %v1914 = vld [vmem:[#allocation11 + $0xb8] sm:$0xff]
    %v1915 = vld [vmem:[#allocation11 + $0xc0] sm:$0xff]
    %v1916 = vld [vmem:[#allocation11 + $0xc8] sm:$0xff]
    %v1917 = vld [vmem:[#allocation11 + $0xd0] sm:$0xff]
    %v1918 = vld [vmem:[#allocation11 + $0xd8] sm:$0xff]
    %v1919 = vld [vmem:[#allocation11 + $0xe0] sm:$0xff]
    %v1920 = vld [vmem:[#allocation11 + $0xe8] sm:$0xff]
    %v1921 = vld [vmem:[#allocation11 + $0xf0] sm:$0xff]
    %v1922 = vld [vmem:[#allocation11 + $0xf8] sm:$0xff]
    %v1923 = vld [vmem:[#allocation11 + $0x100] sm:$0xff]
    %v1924 = vld [vmem:[#allocation11 + $0x108] sm:$0xff]
    %v1925 = vld [vmem:[#allocation11 + $0x110] sm:$0xff]
    %v1926 = vld [vmem:[#allocation11 + $0x118] sm:$0xff]
    %v1927 = vld [vmem:[#allocation11 + $0x120] sm:$0xff]
    %v1928 = vld [vmem:[#allocation11 + $0x128] sm:$0xff]
    %v1929 = vld [vmem:[#allocation11 + $0x130] sm:$0xff]
    %v1930 = vld [vmem:[#allocation11 + $0x138] sm:$0xff]
    %v1931 = vld [vmem:[#allocation11 + $0x140] sm:$0xff]
    %v1932 = vld [vmem:[#allocation11 + $0x148] sm:$0xff]
    %v1933 = vld [vmem:[#allocation11 + $0x150] sm:$0xff]
    %v1934 = vld [vmem:[#allocation11 + $0x158] sm:$0xff]
    %v1935 = vld [vmem:[#allocation11 + $0x160] sm:$0xff]
    %v1936 = vld [vmem:[#allocation11 + $0x168] sm:$0xff]
    %v1937 = vld [vmem:[#allocation11 + $0x170] sm:$0xff]
    %v1938 = vld [vmem:[#allocation11 + $0x178] sm:$0xff]
    %v1939 = vld [vmem:[#allocation11 + $0x180] sm:$0xff]
    %v1940 = vld [vmem:[#allocation11 + $0x188] sm:$0xff]
    %v1941 = vld [vmem:[#allocation11 + $0x190] sm:$0xff]
    %v1942 = vld [vmem:[#allocation11 + $0x198] sm:$0xff]
    %v1943 = vld [vmem:[#allocation11 + $0x1a0] sm:$0xff]
    %v1944 = vld [vmem:[#allocation11 + $0x1a8] sm:$0xff]
    %v1945 = vld [vmem:[#allocation11 + $0x1b0] sm:$0xff]
    %v1946 = vld [vmem:[#allocation11 + $0x1b8] sm:$0xff]
    %v1947 = vld [vmem:[#allocation11 + $0x1c0] sm:$0xff]
    %v1948 = vld [vmem:[#allocation11 + $0x1c8] sm:$0xff]
    %v1949 = vld [vmem:[#allocation11 + $0x1d0] sm:$0xff]
    %v1950 = vld [vmem:[#allocation11 + $0x1d8] sm:$0xff]
    %v1951 = vld [vmem:[#allocation11 + $0x1e0] sm:$0xff]
    %v1952 = vld [vmem:[#allocation11 + $0x1e8] sm:$0xff]
    %v1953 = vld [vmem:[#allocation11 + $0x1f0] sm:$0xff]
    %v1954 = vld [vmem:[#allocation11 + $0x1f8] sm:$0xff]
    %v1955 = vld [vmem:[%s10] sm:$0x3]
    %v1957 = vlaneseq
    %v1958 = vshrl.u32 %v1957, 7
    %v1959 = vsub.s32 0, %v1958
    %v1960 = vrot.slane %v1955, %v1959
    %v1961 = vlaneseq
    %v1962 = vshrl.u32 %v1961, 7
    %v1963 = vsub.s32 1, %v1962
    %v1964 = vrot.slane %v1955, %v1963
    %v2031 = vunpack.c.l.b16 %v1891
    %v2032 = vunpack.c.h.b16 %v1891
    %v2033 = vunpack.c.l.b16 %v1892
    %v2034 = vunpack.c.h.b16 %v1892
    %v2035 = vunpack.c.l.b16 %v1893
    %v2036 = vunpack.c.h.b16 %v1893
    %v2037 = vunpack.c.l.b16 %v1894
    %v2038 = vunpack.c.h.b16 %v1894
    %v2039 = vunpack.c.l.b16 %v1895
    %v2040 = vunpack.c.h.b16 %v1895
    %v2041 = vunpack.c.l.b16 %v1896
    %v2042 = vunpack.c.h.b16 %v1896
    %v2043 = vunpack.c.l.b16 %v1897
    %v2044 = vunpack.c.h.b16 %v1897
    %v2045 = vunpack.c.l.b16 %v1898
    %v2046 = vunpack.c.h.b16 %v1898
    %v2047 = vunpack.c.l.b16 %v1899
    %v2048 = vunpack.c.h.b16 %v1899
    %v2049 = vunpack.c.l.b16 %v1900
    %v2050 = vunpack.c.h.b16 %v1900
    %v2051 = vunpack.c.l.b16 %v1901
    %v2052 = vunpack.c.h.b16 %v1901
    %v2053 = vunpack.c.l.b16 %v1902
    %v2054 = vunpack.c.h.b16 %v1902
    %v2055 = vunpack.c.l.b16 %v1903
    %v2056 = vunpack.c.h.b16 %v1903
    %v2057 = vunpack.c.l.b16 %v1904
    %v2058 = vunpack.c.h.b16 %v1904
    %v2059 = vunpack.c.l.b16 %v1905
    %v2060 = vunpack.c.h.b16 %v1905
    %v2061 = vunpack.c.l.b16 %v1906
    %v2062 = vunpack.c.h.b16 %v1906
    %v2063 = vunpack.c.l.b16 %v1907
    %v2064 = vunpack.c.h.b16 %v1907
    %v2065 = vunpack.c.l.b16 %v1908
    %v2066 = vunpack.c.h.b16 %v1908
    %v2067 = vunpack.c.l.b16 %v1909
    %v2068 = vunpack.c.h.b16 %v1909
    %v2069 = vunpack.c.l.b16 %v1910
    %v2070 = vunpack.c.h.b16 %v1910
    %v2071 = vunpack.c.l.b16 %v1911
    %v2072 = vunpack.c.h.b16 %v1911
    %v2073 = vunpack.c.l.b16 %v1912
    %v2074 = vunpack.c.h.b16 %v1912
    %v2075 = vunpack.c.l.b16 %v1913
    %v2076 = vunpack.c.h.b16 %v1913
    %v2077 = vunpack.c.l.b16 %v1914
    %v2078 = vunpack.c.h.b16 %v1914
    %v2079 = vunpack.c.l.b16 %v1915
    %v2080 = vunpack.c.h.b16 %v1915
    %v2081 = vunpack.c.l.b16 %v1916
    %v2082 = vunpack.c.h.b16 %v1916
    %v2083 = vunpack.c.l.b16 %v1917
    %v2084 = vunpack.c.h.b16 %v1917
    %v2085 = vunpack.c.l.b16 %v1918
    %v2086 = vunpack.c.h.b16 %v1918
    %v2087 = vunpack.c.l.b16 %v1919
    %v2088 = vunpack.c.h.b16 %v1919
    %v2089 = vunpack.c.l.b16 %v1920
    %v2090 = vunpack.c.h.b16 %v1920
    %v2091 = vunpack.c.l.b16 %v1921
    %v2092 = vunpack.c.h.b16 %v1921
    %v2093 = vunpack.c.l.b16 %v1922
    %v2094 = vunpack.c.h.b16 %v1922
    %v2095 = vunpack.c.l.b16 %v1923
    %v2096 = vunpack.c.h.b16 %v1923
    %v2097 = vunpack.c.l.b16 %v1924
    %v2098 = vunpack.c.h.b16 %v1924
    %v2099 = vunpack.c.l.b16 %v1925
    %v2100 = vunpack.c.h.b16 %v1925
    %v2101 = vunpack.c.l.b16 %v1926
    %v2102 = vunpack.c.h.b16 %v1926
    %v2103 = vunpack.c.l.b16 %v1927
    %v2104 = vunpack.c.h.b16 %v1927
    %v2105 = vunpack.c.l.b16 %v1928
    %v2106 = vunpack.c.h.b16 %v1928
    %v2107 = vunpack.c.l.b16 %v1929
    %v2108 = vunpack.c.h.b16 %v1929
    %v2109 = vunpack.c.l.b16 %v1930
    %v2110 = vunpack.c.h.b16 %v1930
    %v2111 = vunpack.c.l.b16 %v1931
    %v2112 = vunpack.c.h.b16 %v1931
    %v2113 = vunpack.c.l.b16 %v1932
    %v2114 = vunpack.c.h.b16 %v1932
    %v2115 = vunpack.c.l.b16 %v1933
    %v2116 = vunpack.c.h.b16 %v1933
    %v2117 = vunpack.c.l.b16 %v1934
    %v2118 = vunpack.c.h.b16 %v1934
    %v2119 = vunpack.c.l.b16 %v1935
    %v2120 = vunpack.c.h.b16 %v1935
    %v2121 = vunpack.c.l.b16 %v1936
    %v2122 = vunpack.c.h.b16 %v1936
    %v2123 = vunpack.c.l.b16 %v1937
    %v2124 = vunpack.c.h.b16 %v1937
    %v2125 = vunpack.c.l.b16 %v1938
    %v2126 = vunpack.c.h.b16 %v1938
    %v2127 = vunpack.c.l.b16 %v1939
    %v2128 = vunpack.c.h.b16 %v1939
    %v2129 = vunpack.c.l.b16 %v1940
    %v2130 = vunpack.c.h.b16 %v1940
    %v2131 = vunpack.c.l.b16 %v1941
    %v2132 = vunpack.c.h.b16 %v1941
    %v2133 = vunpack.c.l.b16 %v1942
    %v2134 = vunpack.c.h.b16 %v1942
    %v2135 = vunpack.c.l.b16 %v1943
    %v2136 = vunpack.c.h.b16 %v1943
    %v2137 = vunpack.c.l.b16 %v1944
    %v2138 = vunpack.c.h.b16 %v1944
    %v2139 = vunpack.c.l.b16 %v1945
    %v2140 = vunpack.c.h.b16 %v1945
    %v2141 = vunpack.c.l.b16 %v1946
    %v2142 = vunpack.c.h.b16 %v1946
    %v2143 = vunpack.c.l.b16 %v1947
    %v2144 = vunpack.c.h.b16 %v1947
    %v2145 = vunpack.c.l.b16 %v1948
    %v2146 = vunpack.c.h.b16 %v1948
    %v2147 = vunpack.c.l.b16 %v1949
    %v2148 = vunpack.c.h.b16 %v1949
    %v2149 = vunpack.c.l.b16 %v1950
    %v2150 = vunpack.c.h.b16 %v1950
    %v2151 = vunpack.c.l.b16 %v1951
    %v2152 = vunpack.c.h.b16 %v1951
    %v2153 = vunpack.c.l.b16 %v1952
    %v2154 = vunpack.c.h.b16 %v1952
    %v2155 = vunpack.c.l.b16 %v1953
    %v2156 = vunpack.c.h.b16 %v1953
    %v2157 = vunpack.c.l.b16 %v1954
    %v2158 = vunpack.c.h.b16 %v1954
    %v2159 = vpack.c.b16 %v2033, %v2031
    %v2160 = vpack.c.b16 %v2034, %v2032
    %v2161 = vpack.c.b16 %v2037, %v2035
    %v2162 = vpack.c.b16 %v2038, %v2036
    %v2163 = vpack.c.b16 %v2041, %v2039
    %v2164 = vpack.c.b16 %v2042, %v2040
    %v2165 = vpack.c.b16 %v2045, %v2043
    %v2166 = vpack.c.b16 %v2046, %v2044
    %v2167 = vpack.c.b16 %v2049, %v2047
    %v2168 = vpack.c.b16 %v2050, %v2048
    %v2169 = vpack.c.b16 %v2053, %v2051
    %v2170 = vpack.c.b16 %v2054, %v2052
    %v2171 = vpack.c.b16 %v2057, %v2055
    %v2172 = vpack.c.b16 %v2058, %v2056
    %v2173 = vpack.c.b16 %v2061, %v2059
    %v2174 = vpack.c.b16 %v2062, %v2060
    %v2175 = vpack.c.b16 %v2065, %v2063
    %v2176 = vpack.c.b16 %v2066, %v2064
    %v2177 = vpack.c.b16 %v2069, %v2067
    %v2178 = vpack.c.b16 %v2070, %v2068
    %v2179 = vpack.c.b16 %v2073, %v2071
    %v2180 = vpack.c.b16 %v2074, %v2072
    %v2181 = vpack.c.b16 %v2077, %v2075
    %v2182 = vpack.c.b16 %v2078, %v2076
    %v2183 = vpack.c.b16 %v2081, %v2079
    %v2184 = vpack.c.b16 %v2082, %v2080
    %v2185 = vpack.c.b16 %v2085, %v2083
    %v2186 = vpack.c.b16 %v2086, %v2084
    %v2187 = vpack.c.b16 %v2089, %v2087
    %v2188 = vpack.c.b16 %v2090, %v2088
    %v2189 = vpack.c.b16 %v2093, %v2091
    %v2190 = vpack.c.b16 %v2094, %v2092
    %v2191 = vpack.c.b16 %v2097, %v2095
    %v2192 = vpack.c.b16 %v2098, %v2096
    %v2193 = vpack.c.b16 %v2101, %v2099
    %v2194 = vpack.c.b16 %v2102, %v2100
    %v2195 = vpack.c.b16 %v2105, %v2103
    %v2196 = vpack.c.b16 %v2106, %v2104
    %v2197 = vpack.c.b16 %v2109, %v2107
    %v2198 = vpack.c.b16 %v2110, %v2108
    %v2199 = vpack.c.b16 %v2113, %v2111
    %v2200 = vpack.c.b16 %v2114, %v2112
    %v2201 = vpack.c.b16 %v2117, %v2115
    %v2202 = vpack.c.b16 %v2118, %v2116
    %v2203 = vpack.c.b16 %v2121, %v2119
    %v2204 = vpack.c.b16 %v2122, %v2120
    %v2205 = vpack.c.b16 %v2125, %v2123
    %v2206 = vpack.c.b16 %v2126, %v2124
    %v2207 = vpack.c.b16 %v2129, %v2127
    %v2208 = vpack.c.b16 %v2130, %v2128
    %v2209 = vpack.c.b16 %v2133, %v2131
    %v2210 = vpack.c.b16 %v2134, %v2132
    %v2211 = vpack.c.b16 %v2137, %v2135
    %v2212 = vpack.c.b16 %v2138, %v2136
    %v2213 = vpack.c.b16 %v2141, %v2139
    %v2214 = vpack.c.b16 %v2142, %v2140
    %v2215 = vpack.c.b16 %v2145, %v2143
    %v2216 = vpack.c.b16 %v2146, %v2144
    %v2217 = vpack.c.b16 %v2149, %v2147
    %v2218 = vpack.c.b16 %v2150, %v2148
    %v2219 = vpack.c.b16 %v2153, %v2151
    %v2220 = vpack.c.b16 %v2154, %v2152
    %v2221 = vpack.c.b16 %v2157, %v2155
    %v2222 = vpack.c.b16 %v2158, %v2156
    %2287 = vmatprep.subr.bf16.mxu0 %v2160
    %2288 = vmatpush1.bf16.msra.mxu0 %v2159
    %2289 = vmatprep.subr.bf16.mxu0 %v2162
    %2290 = vmatpush1.bf16.msra.mxu0 %v2161
    %2291 = vmatprep.subr.bf16.mxu0 %v2164
    %2292 = vmatpush1.bf16.msra.mxu0 %v2163
    %2293 = vmatprep.subr.bf16.mxu0 %v2166
    %2294 = vmatpush1.bf16.msra.mxu0 %v2165
    %2295 = vmatprep.subr.bf16.mxu0 %v2168
    %2296 = vmatpush1.bf16.msra.mxu0 %v2167
    %2297 = vmatprep.subr.bf16.mxu0 %v2170
    %2298 = vmatpush1.bf16.msra.mxu0 %v2169
    %2299 = vmatprep.subr.bf16.mxu0 %v2172
    %2300 = vmatpush1.bf16.msra.mxu0 %v2171
    %2301 = vmatprep.subr.bf16.mxu0 %v2174
    %2302 = vmatpush1.bf16.msra.mxu0 %v2173
    %2303 = vmatprep.subr.bf16.mxu0 %v2176
    %2304 = vmatpush1.bf16.msra.mxu0 %v2175
    %2305 = vmatprep.subr.bf16.mxu0 %v2178
    %2306 = vmatpush1.bf16.msra.mxu0 %v2177
    %2307 = vmatprep.subr.bf16.mxu0 %v2180
    %2308 = vmatpush1.bf16.msra.mxu0 %v2179
    %2309 = vmatprep.subr.bf16.mxu0 %v2182
    %2310 = vmatpush1.bf16.msra.mxu0 %v2181
    %2311 = vmatprep.subr.bf16.mxu0 %v2184
    %2312 = vmatpush1.bf16.msra.mxu0 %v2183
    %2313 = vmatprep.subr.bf16.mxu0 %v2186
    %2314 = vmatpush1.bf16.msra.mxu0 %v2185
    %2315 = vmatprep.subr.bf16.mxu0 %v2188
    %2316 = vmatpush1.bf16.msra.mxu0 %v2187
    %2317 = vmatprep.subr.bf16.mxu0 %v2190
    %2318 = vmatpush1.bf16.msra.mxu0 %v2189
    %2319 = vmatprep.mubr.bf16.mxu0 %v1888
    %2320 = vmatmul.mubr.bf16.gmra.mrb[0].mxu0 %v1887
    %v2321 = vpop.f32.mrb[0].mxu0
    %v2322 = vadd.f32 %v1960, %v2321
    %v2323 = vpop.f32.mrb[0].mxu0
    %v2324 = vadd.f32 %v1964, %v2323
    %v2325 = vpop.f32.mrb[0].mxu0
    %v2326 = vadd.f32 %v1960, %v2325
    %v2327 = vpop.f32.mrb[0].mxu0
    %v2328 = vadd.f32 %v1964, %v2327
    %2329 = vdwg.mxu0
    %2330 = vmatprep.subr.bf16.mxu0 %v2192
    %2331 = vmatpush1.bf16.msra.mxu0 %v2191
    %2332 = vmatprep.subr.bf16.mxu0 %v2194
    %2333 = vmatpush1.bf16.msra.mxu0 %v2193
    %2334 = vmatprep.subr.bf16.mxu0 %v2196
    %2335 = vmatpush1.bf16.msra.mxu0 %v2195
    %2336 = vmatprep.subr.bf16.mxu0 %v2198
    %2337 = vmatpush1.bf16.msra.mxu0 %v2197
    %2338 = vmatprep.subr.bf16.mxu0 %v2200
    %2339 = vmatpush1.bf16.msra.mxu0 %v2199
    %2340 = vmatprep.subr.bf16.mxu0 %v2202
    %2341 = vmatpush1.bf16.msra.mxu0 %v2201
    %2342 = vmatprep.subr.bf16.mxu0 %v2204
    %2343 = vmatpush1.bf16.msra.mxu0 %v2203
    %2344 = vmatprep.subr.bf16.mxu0 %v2206
    %2345 = vmatpush1.bf16.msra.mxu0 %v2205
    %2346 = vmatprep.subr.bf16.mxu0 %v2208
    %2347 = vmatpush1.bf16.msra.mxu0 %v2207
    %2348 = vmatprep.subr.bf16.mxu0 %v2210
    %2349 = vmatpush1.bf16.msra.mxu0 %v2209
    %2350 = vmatprep.subr.bf16.mxu0 %v2212
    %2351 = vmatpush1.bf16.msra.mxu0 %v2211
    %2352 = vmatprep.subr.bf16.mxu0 %v2214
    %2353 = vmatpush1.bf16.msra.mxu0 %v2213
    %2354 = vmatprep.subr.bf16.mxu0 %v2216
    %2355 = vmatpush1.bf16.msra.mxu0 %v2215
    %2356 = vmatprep.subr.bf16.mxu0 %v2218
    %2357 = vmatpush1.bf16.msra.mxu0 %v2217
    %2358 = vmatprep.subr.bf16.mxu0 %v2220
    %2359 = vmatpush1.bf16.msra.mxu0 %v2219
    %2360 = vmatprep.subr.bf16.mxu0 %v2222
    %2361 = vmatpush1.bf16.msra.mxu0 %v2221
    %2362 = vmatprep.mubr.bf16.mxu0 %v1890
    %2363 = vmatmul.mubr.bf16.gmra.mrb[0].mxu0 %v1889
    %v2364 = vpop.f32.mrb[0].mxu0
    %v2365 = vadd.f32 %v2322, %v2364
    %v2366 = vpop.f32.mrb[0].mxu0
    %v2367 = vadd.f32 %v2324, %v2366
    %v2368 = vpop.f32.mrb[0].mxu0
    %v2369 = vadd.f32 %v2326, %v2368
    %v2370 = vpop.f32.mrb[0].mxu0
    %v2371 = vadd.f32 %v2328, %v2370
    %2372 = vdwg.mxu0
    %v2373 = vxor.u32 %v2365, 2147483648
    %v2374 = vxor.u32 %v2367, 2147483648
    %v2375 = vxor.u32 %v2369, 2147483648
    %v2376 = vxor.u32 %v2371, 2147483648
    %v2377 = vmul.f32 %v2373, 1.442695
    %v2378 = vpow.pop %v2377
    %v2379 = vmul.f32 %v2374, 1.442695
    %v2380 = vpow.pop %v2379
    %v2381 = vmul.f32 %v2375, 1.442695
    %v2382 = vpow.pop %v2381
    %v2383 = vmul.f32 %v2376, 1.442695
    %v2384 = vpow.pop %v2383
    %v2385 = vadd.f32 %v2378, 1.0
    %v2386 = vadd.f32 %v2380, 1.0
    %v2387 = vadd.f32 %v2382, 1.0
    %v2388 = vadd.f32 %v2384, 1.0
    %v2389 = vrcp.pop %v2385
    %v2390 = vmul.f32 1.0, %v2389
    %v2391 = vrcp.pop %v2386
    %v2392 = vmul.f32 1.0, %v2391
    %v2393 = vrcp.pop %v2387
    %v2394 = vmul.f32 1.0, %v2393
    %v2395 = vrcp.pop %v2388
    %v2396 = vmul.f32 1.0, %v2395
    %2397 = vst [vmem:[#allocation13] sm:$0xff] %v2390
    %2398 = vst [vmem:[#allocation13 + $0x8] sm:$0xff] %v2392
    %2399 = vst [vmem:[#allocation13 + $0x10] sm:$0xff] %v2394
    %2400 = vst [vmem:[#allocation13 + $0x18] sm:$0xff] %v2396
    // Predicated region
    $region70: #{tpu_custom_call.1} parent=1 // pred_check
      _
    $region71: #{tpu_custom_call.1} parent=1 // pred_check_branch
      %2402 = sbr.rel (0) target = $region73
    $region72: #{tpu_custom_call.1} parent=1 // pred_region
      %s2404 = ssub.s32 512, 512
      %2405 = vsyncadd [#allocation4], %s2404
      %s2406 = sshll.u32 [#allocation13], 4
      %s2407 = int_to_ptr.vmem [resolvable:$true] %s2406
      %2412 = dma.vmem_to_hbm [thread:$0]  %s2407, 512, %s11, [#allocation4], 256, 256, 16
    $region73: #{tpu_custom_call.1} parent=1 // pred_fallthru
      _
    // Predicated region
    $region74: #{tpu_custom_call.1} parent=1 // pred_check
      _
    $region75: #{tpu_custom_call.1} parent=1 // pred_check_branch
      %2414 = sbr.rel (0) target = $region77
    $region76: #{tpu_custom_call.1} parent=1 // pred_region
      %2415 = dma.done [#allocation4], 512
    $region77: #{tpu_custom_call.1} parent=1 // pred_fallthru
      _
    %2416 = vsyncpa [#allocation3], 1
    %2417 = vsyncpa [#allocation6], 1
    %2418 = vsyncpa [#allocation9], 1
    %2419 = vsyncpa [#allocation12], 1
    %2420 = vsyncpa [#allocation4], 1

</llo_original>
